<compile_context>
chip_gen: v6e
topology: v6e:2x2x1
jax: 0.10.0
libtpu: 0.0.40
codegen_flags: <defaults>
</compile_context>

<pallas_src>
import math
from functools import partial

import jax
import jax.numpy as jnp
import numpy as np
from jax import lax
from jax.experimental import pallas as pl
from jax.experimental.pallas import tpu as pltpu


# ----------------------------------------------------------------------------
# Kernel: grid = (batch_block, layer).  Activations + mask stay VMEM-resident.
# ----------------------------------------------------------------------------
def transformer_stack_kernel(items_ref, x_ref,
                             wqkv_ref, wo_ref, w1_ref, w2_ref,
                             vecs_ref, bf1_ref,
                             out_ref,
                             mask_ref,
                             *, nhead, eps, bidirectional):
    layer = pl.program_id(1)
    Bb, L, E = out_ref.shape
    H = nhead
    D = E // H
    f32 = jnp.float32
    bf16 = jnp.bfloat16

    @pl.when(layer == 0)
    def _init():
        # Seed the VMEM-resident activation carry and build the (Bb, L, L) mask ONCE per
        # batch block; both persist across the (inner, "arbitrary") layer grid axis.
        out_ref[...] = x_ref[...]
        valid = items_ref[...] != 0                              # (Bb, L) key-padding
        for bi in range(Bb):
            m = jnp.broadcast_to(valid[bi:bi + 1, :], (L, L))
            if not bidirectional:
                row = lax.broadcasted_iota(jnp.int32, (L, L), 0)
                col = lax.broadcasted_iota(jnp.int32, (L, L), 1)
                m = jnp.logical_and(m, row >= col)               # causal (tril)
            mask_ref[bi] = jnp.where(m, f32(1.0), f32(0.0))

    # packed per-layer small vectors: [bq(pre-scaled), bk, bv, bo, g1, be1, bf2, g2, be2]
    vecs = vecs_ref[0]                                           # (9, E)
    bq, bk, bv = vecs[0:1], vecs[1:2], vecs[2:3]
    bo, g1, be1 = vecs[3:4], vecs[4:5], vecs[5:6]
    bf2, g2, be2 = vecs[6:7], vecs[7:8], vecs[8:9]
    bf1 = bf1_ref[0]                                             # (1, Hff)

    # running activations (f32); leading-dim collapse is layout-free when L % 8 == 0
    x = out_ref[...].reshape(Bb * L, E)
    xb = x.astype(bf16)

    # ---- fused QKV projection: one lane-dense (E, 3E) matmul, no activation broadcast ----
    qkv = jnp.dot(xb, wqkv_ref[0], preferred_element_type=f32)   # (Bb*L, 3E)
    q = qkv[:, :E] + bq          # 1/sqrt(head_dim) already folded into Wq / bq
    k = qkv[:, E:2 * E] + bk
    v = qkv[:, 2 * E:] + bv

    # ---- attention: per-sequence, per-head 2-D matmuls (one (L,L) score block live) ----
    ctx_rows = []
    for bi in range(Bb):
        r0 = bi * L
        mask_b = mask_ref[bi]                                    # (L, L) f32 0/1
        heads = []
        for h in range(H):
            c0 = h * D
            qh = q[r0:r0 + L, c0:c0 + D].astype(bf16)
            kh = k[r0:r0 + L, c0:c0 + D].astype(bf16)
            vh = v[r0:r0 + L, c0:c0 + D].astype(bf16)
            s = jnp.einsum("qd,kd->qk", qh, kh,
                           preferred_element_type=f32)           # (L, L)
            s = jnp.where(mask_b > 0.0, s, f32(-1e10))           # masked_fill semantics
            s = s - jnp.max(s, axis=-1, keepdims=True)
            p = jnp.exp(s)
            p = p * pl.reciprocal(jnp.sum(p, axis=-1, keepdims=True), approx=True)
            heads.append(jnp.dot(p.astype(bf16), vh,
                                 preferred_element_type=f32))    # (L, D)
        ctx_rows.append(jnp.concatenate(heads, axis=-1))         # (L, E), PyTorch head order
    ctx = ctx_rows[0] if Bb == 1 else jnp.concatenate(ctx_rows, axis=0)   # (Bb*L, E)

    # ---- fused output projection: ONE full-depth (K = E) matmul, no (H,L,E) intermediate ----
    attn = jnp.dot(ctx.astype(bf16), wo_ref[0], preferred_element_type=f32) + bo

    def layer_norm(y, gamma, beta):
        mu = jnp.mean(y, axis=-1, keepdims=True)
        var = jnp.mean((y - mu) ** 2, axis=-1, keepdims=True)
        return (y - mu) * lax.rsqrt(var + f32(eps)) * gamma + beta

    # residual + LayerNorm 1
    x1 = layer_norm(x + attn, g1, be1)

    # ---- point-wise feed-forward (exact erf GELU, like F.gelu) ----
    h1 = jnp.dot(x1.astype(bf16), w1_ref[0], preferred_element_type=f32) + bf1
    h1 = 0.5 * h1 * (1.0 + lax.erf(h1 * f32(1.0 / math.sqrt(2.0))))
    h2 = jnp.dot(h1.astype(bf16), w2_ref[0], preferred_element_type=f32) + bf2

    # residual + LayerNorm 2 -> carry for the next layer
    out_ref[...] = layer_norm(x1 + h2, g2, be2).reshape(Bb, L, E)


# ----------------------------------------------------------------------------
# Wrapper: host-side weight packing + a single pallas_call for the whole stack.
# ----------------------------------------------------------------------------
def _pick_batch_block(B, L, max_bb=8):
    if L % 8 != 0:           # keep the (Bb, L, E) <-> (Bb*L, E) reshape layout-free
        return 1
    bb = min(B, max_bb)
    while B % bb != 0:
        bb -= 1
    return bb


def transformer_forward(item_input, seq_embedding, layer_params, *,
                        nhead, eps, bidirectional=False, max_batch_block=8):
    B, L = item_input.shape
    E = seq_embedding.shape[-1]
    NB = len(layer_params)
    D = E // nhead
    Hff = layer_params[0]["w1"].shape[1]
    scale = math.sqrt(D)
    Bb = _pick_batch_block(B, L, max_batch_block)

    # Pack: fused (E, 3E) QKV weight (Q pre-scaled by 1/sqrt(D)), bf16 weights,
    # all small per-layer vectors in one (9, E) block (+ fc1 bias as (1, Hff)).
    def pack(p):
        wqkv = jnp.concatenate([p["wq"] / scale, p["wk"], p["wv"]], axis=1)   # (E, 3E)
        vecs = jnp.stack([p["bq"] / scale, p["bk"], p["bv"], p["bo"],
                          p["g1"], p["be1"], p["bf2"], p["g2"], p["be2"]], axis=0)  # (9, E)
        return dict(
            wqkv=wqkv.astype(jnp.bfloat16),
            wo=p["wo"].astype(jnp.bfloat16),
            w1=p["w1"].astype(jnp.bfloat16),
            w2=p["w2"].astype(jnp.bfloat16),
            vecs=vecs.astype(jnp.float32),
            bf1=p["bf1"].reshape(1, Hff).astype(jnp.float32))

    packed = [pack(p) for p in layer_params]
    stacked = {k: jnp.stack([q[k] for q in packed], axis=0) for k in packed[0]}

    items = item_input.astype(jnp.int32)
    x = seq_embedding.astype(jnp.float32)

    kernel = partial(transformer_stack_kernel, nhead=nhead, eps=eps,
                     bidirectional=bidirectional)

    def per_layer(shape):
        # Weight blocks indexed only by the layer grid axis (double-buffered prefetch).
        return pl.BlockSpec((1,) + shape, lambda b, l: (l,) + (0,) * len(shape))

    in_specs = [
        pl.BlockSpec((Bb, L), lambda b, l: (b, 0)),          # item-id rows
        pl.BlockSpec((Bb, L, E), lambda b, l: (b, 0, 0)),    # input embeddings
        per_layer((E, 3 * E)),                               # fused QKV weight (bf16)
        per_layer((E, E)),                                   # Wo (bf16)
        per_layer((E, Hff)),                                 # fc1 W (bf16)
        per_layer((Hff, E)),                                 # fc2 W (bf16)
        per_layer((9, E)),                                   # packed small vectors (f32)
        per_layer((1, Hff)),                                 # fc1 bias (f32)
    ]
    out_spec = pl.BlockSpec((Bb, L, E), lambda b, l: (b, 0, 0))

    # Explicit scoped-VMEM budget sized from the real footprint (capped for v7x's 64 MiB,
    # floored so small configs keep a comfortable compile margin).
    w_bytes = 2 * 2 * (E * 3 * E + E * E + E * Hff + Hff * E)      # bf16 weights, x2 buffers
    v_bytes = 2 * 4 * (9 * E + Hff)
    a_bytes = 4 * Bb * L * E * 8 + 4 * Bb * L * (3 * E + Hff)       # carry + working set
    a_bytes += 4 * (Bb * L * L + 4 * L * L)                         # mask scratch + scores
    est = w_bytes + v_bytes + a_bytes + (8 << 20)
    vmem_limit = int(min(max(est, 32 << 20), 100 << 20))

    return pl.pallas_call(
        kernel,
        out_shape=jax.ShapeDtypeStruct((B, L, E), jnp.float32),
        grid=(B // Bb, NB),
        in_specs=in_specs,
        out_specs=out_spec,
        scratch_shapes=[pltpu.VMEM((Bb, L, L), jnp.float32)],        # hoisted attention mask
        compiler_params=pltpu.CompilerParams(
            dimension_semantics=("parallel", "arbitrary"),
            vmem_limit_bytes=vmem_limit),
    )(items, x, stacked["wqkv"], stacked["wo"], stacked["w1"], stacked["w2"],
      stacked["vecs"], stacked["bf1"])


# ----------------------------------------------------------------------------
# Pure-JAX reference (mirrors the same bf16-matmul / f32-statistics precision).
# ----------------------------------------------------------------------------
def ref_forward(item_input, x, layer_params, *, nhead, eps, bidirectional=False):
    B, L = item_input.shape
    E = x.shape[-1]
    hd = E // nhead
    scale = math.sqrt(hd)
    mask = (item_input != 0)[:, None, :]
    mask = jnp.broadcast_to(mask, (B, L, L))
    if not bidirectional:
        mask = jnp.tril(mask)

    def mm(a, w):
        return jnp.dot(a.astype(jnp.bfloat16), w.astype(jnp.bfloat16),
                       preferred_element_type=jnp.float32)

    def ln(y, g, b):
        mu = jnp.mean(y, -1, keepdims=True)
        var = jnp.mean((y - mu) ** 2, -1, keepdims=True)
        return (y - mu) / jnp.sqrt(var + eps) * g + b

    x = x.astype(jnp.float32)
    for p in layer_params:
        q = (mm(x, p["wq"]) + p["bq"]) / scale
        k = mm(x, p["wk"]) + p["bk"]
        v = mm(x, p["wv"]) + p["bv"]
        q = q.reshape(B, L, nhead, hd).transpose(0, 2, 1, 3)
        k = k.reshape(B, L, nhead, hd).transpose(0, 2, 1, 3)
        v = v.reshape(B, L, nhead, hd).transpose(0, 2, 1, 3)
        energy = jnp.einsum("bhqd,bhkd->bhqk", q.astype(jnp.bfloat16),
                            k.astype(jnp.bfloat16),
                            preferred_element_type=jnp.float32)
        energy = jnp.where(mask[:, None] == 0, -1e10, energy)
        a = jax.nn.softmax(energy, axis=-1)
        o = jnp.einsum("bhqk,bhkd->bhqd", a.astype(jnp.bfloat16),
                       v.astype(jnp.bfloat16),
                       preferred_element_type=jnp.float32)
        o = o.transpose(0, 2, 1, 3).reshape(B, L, E)
        o = mm(o, p["wo"]) + p["bo"]
        x1 = ln(x + o, p["g1"], p["be1"])
        h = jax.nn.gelu(mm(x1, p["w1"]) + p["bf1"], approximate=False)
        h2 = mm(h, p["w2"]) + p["bf2"]
        x = ln(x1 + h2, p["g2"], p["be2"])
    return x


# ----------------------------------------------------------------------------
# Deterministic parameter construction.
# ----------------------------------------------------------------------------
def init_layer_params(key, embed_size, ffn_hidden):
    E, H = embed_size, ffn_hidden
    ks = jax.random.split(key, 16)
    s = 0.02
    n = lambda k, shape: s * jax.random.normal(k, shape, jnp.float32)
    return {
        "wq": n(ks[0], (E, E)), "bq": n(ks[1], (E,)),
        "wk": n(ks[2], (E, E)), "bk": n(ks[3], (E,)),
        "wv": n(ks[4], (E, E)), "bv": n(ks[5], (E,)),
        "wo": n(ks[6], (E, E)), "bo": n(ks[7], (E,)),
        "g1": 1.0 + n(ks[8], (E,)), "be1": n(ks[9], (E,)),
        "w1": n(ks[10], (E, H)), "bf1": n(ks[11], (H,)),
        "w2": n(ks[12], (H, E)), "bf2": n(ks[13], (E,)),
        "g2": 1.0 + n(ks[14], (E,)), "be2": n(ks[15], (E,)),
    }


if __name__ == "__main__":
    # Small shapes consistent with the module's forward.
    B, L, E, Hff = 2, 8, 32, 64
    NUM_BLOCKS, NUM_HEADS = 2, 4
    EPS = 0.02                      # layer_norm_eps default in the module
    BIDIRECTIONAL = False           # default -> causal tril mask

    root = jax.random.PRNGKey(0)
    k_item, k_emb, k_par = jax.random.split(root, 3)

    item_input = jax.random.randint(k_item, (B, L), 0, 5, dtype=jnp.int32)
    seq_embedding = jax.random.normal(k_emb, (B, L, E), jnp.float32)

    layer_params = [
        init_layer_params(k, E, Hff) for k in jax.random.split(k_par, NUM_BLOCKS)
    ]

    out = transformer_forward(item_input, seq_embedding, layer_params,
                              nhead=NUM_HEADS, eps=EPS,
                              bidirectional=BIDIRECTIONAL)
    out = jax.block_until_ready(out)

    ref = ref_forward(item_input, seq_embedding, layer_params,
                      nhead=NUM_HEADS, eps=EPS, bidirectional=BIDIRECTIONAL)
    ref = jax.block_until_ready(ref)

    assert out.shape == (B, L, E)
    assert bool(jnp.all(jnp.isfinite(out)))
    np.testing.assert_allclose(np.asarray(out), np.asarray(ref),
                               rtol=2e-2, atol=2e-2)
    print("KERNEL_OK")
</pallas_src>

<mosaic_0001>
module attributes {stable_mosaic.version = 11 : i64} {
  func.func @transformer_stack_kernel(%arg0: i32, %arg1: i32, %arg2: memref<2x8xi32, #tpu.memory_space<vmem>>, %arg3: memref<2x8x32xf32, #tpu.memory_space<vmem>>, %arg4: memref<1x32x96xbf16, #tpu.memory_space<vmem>>, %arg5: memref<1x32x32xbf16, #tpu.memory_space<vmem>>, %arg6: memref<1x32x64xbf16, #tpu.memory_space<vmem>>, %arg7: memref<1x64x32xbf16, #tpu.memory_space<vmem>>, %arg8: memref<1x9x32xf32, #tpu.memory_space<vmem>>, %arg9: memref<1x1x64xf32, #tpu.memory_space<vmem>>, %arg10: memref<2x8x32xf32, #tpu.memory_space<vmem>>, %arg11: memref<2x8x8xf32, #tpu.memory_space<vmem>>) attributes {dimension_semantics = [#tpu.dimension_semantics<parallel>, #tpu.dimension_semantics<arbitrary>], iteration_bounds = array<i64: 1, 2>, scalar_prefetch = 0 : i64, scratch_operands = 1 : i64, tpu.core_type = #tpu.core_type<tc>, window_params = [{transform_indices = @transform_0, window_bounds = array<i64: 2, 8>}, {transform_indices = @transform_1, window_bounds = array<i64: 2, 8, 32>}, {transform_indices = @transform_2, window_bounds = array<i64: 1, 32, 96>}, {transform_indices = @transform_3, window_bounds = array<i64: 1, 32, 32>}, {transform_indices = @transform_4, window_bounds = array<i64: 1, 32, 64>}, {transform_indices = @transform_5, window_bounds = array<i64: 1, 64, 32>}, {transform_indices = @transform_6, window_bounds = array<i64: 1, 9, 32>}, {transform_indices = @transform_7, window_bounds = array<i64: 1, 1, 64>}, {transform_indices = @transform_8, window_bounds = array<i64: 2, 8, 32>}]} {
    %c0_i32 = arith.constant 0 : i32
    %0 = arith.cmpi eq, %arg1, %c0_i32 : i32
    %1 = arith.extui %0 : i1 to i32
    %c0_i32_0 = arith.constant 0 : i32
    %2 = arith.cmpi ne, %1, %c0_i32_0 : i32
    scf.if %2 {
      %c0_93 = arith.constant 0 : index
      %c0_94 = arith.constant 0 : index
      %c0_95 = arith.constant 0 : index
      %296 = vector.load %arg3[%c0_93, %c0_94, %c0_95] : memref<2x8x32xf32, #tpu.memory_space<vmem>>, vector<2x8x32xf32>
      %c0_96 = arith.constant 0 : index
      %c0_97 = arith.constant 0 : index
      %c0_98 = arith.constant 0 : index
      %297 = vector.load %arg10[%c0_96, %c0_97, %c0_98] : memref<2x8x32xf32, #tpu.memory_space<vmem>>, vector<2x8x32xf32>
      tpu.vector_store %arg10[%c0_96, %c0_97, %c0_98], %296 {strides = array<i32>} : memref<2x8x32xf32, #tpu.memory_space<vmem>>, vector<2x8x32xf32>,
      %c0_99 = arith.constant 0 : index
      %c0_100 = arith.constant 0 : index
      %298 = vector.load %arg2[%c0_99, %c0_100] : memref<2x8xi32, #tpu.memory_space<vmem>>, vector<2x8xi32>
      %c0_i32_101 = arith.constant 0 : i32
      %299 = vector.broadcast %c0_i32_101 : i32 to vector<2x8xi32>
      %300 = arith.cmpi ne, %298, %299 : vector<2x8xi32>
      %301 = vector.extract_strided_slice %300 {offsets = [0, 0], sizes = [1, 8], strides = [1, 1]} : vector<2x8xi1> to vector<1x8xi1>
      %302 = vector.shape_cast %301 : vector<1x8xi1> to vector<1x8xi1>
      %303 = vector.broadcast %302 : vector<1x8xi1> to vector<8x8xi1>
      %304 = tpu.iota {dimensions = array<i32: 0>} : vector<8x8xi32>
      %305 = tpu.iota {dimensions = array<i32: 1>} : vector<8x8xi32>
      %306 = arith.cmpi sge, %304, %305 : vector<8x8xi32>
      %307 = arith.andi %303, %306 : vector<8x8xi1>
      %cst_102 = arith.constant 1.000000e+00 : f32
      %cst_103 = arith.constant 0.000000e+00 : f32
      %308 = vector.broadcast %cst_102 : f32 to vector<8x8xf32>
      %309 = vector.broadcast %cst_103 : f32 to vector<8x8xf32>
      %310 = arith.select %307, %308, %309 : vector<8x8xi1>, vector<8x8xf32>
      %c0_104 = arith.constant 0 : index
      %c0_105 = arith.constant 0 : index
      %c0_106 = arith.constant 0 : index
      %311 = vector.load %arg11[%c0_104, %c0_105, %c0_106] : memref<2x8x8xf32, #tpu.memory_space<vmem>>, vector<1x8x8xf32>
      %312 = vector.shape_cast %311 : vector<1x8x8xf32> to vector<8x8xf32>
      %313 = vector.shape_cast %310 : vector<8x8xf32> to vector<1x8x8xf32>
      tpu.vector_store %arg11[%c0_104, %c0_105, %c0_106], %313 {strides = array<i32>} : memref<2x8x8xf32, #tpu.memory_space<vmem>>, vector<1x8x8xf32>,
      %314 = vector.extract_strided_slice %300 {offsets = [1, 0], sizes = [1, 8], strides = [1, 1]} : vector<2x8xi1> to vector<1x8xi1>
      %315 = vector.shape_cast %314 : vector<1x8xi1> to vector<1x8xi1>
      %316 = vector.broadcast %315 : vector<1x8xi1> to vector<8x8xi1>
      %317 = tpu.iota {dimensions = array<i32: 0>} : vector<8x8xi32>
      %318 = tpu.iota {dimensions = array<i32: 1>} : vector<8x8xi32>
      %319 = arith.cmpi sge, %317, %318 : vector<8x8xi32>
      %320 = arith.andi %316, %319 : vector<8x8xi1>
      %cst_107 = arith.constant 1.000000e+00 : f32
      %cst_108 = arith.constant 0.000000e+00 : f32
      %321 = vector.broadcast %cst_107 : f32 to vector<8x8xf32>
      %322 = vector.broadcast %cst_108 : f32 to vector<8x8xf32>
      %323 = arith.select %320, %321, %322 : vector<8x8xi1>, vector<8x8xf32>
      %c1_109 = arith.constant 1 : index
      %c0_110 = arith.constant 0 : index
      %c0_111 = arith.constant 0 : index
      %324 = vector.load %arg11[%c1_109, %c0_110, %c0_111] : memref<2x8x8xf32, #tpu.memory_space<vmem>>, vector<1x8x8xf32>
      %325 = vector.shape_cast %324 : vector<1x8x8xf32> to vector<8x8xf32>
      %326 = vector.shape_cast %323 : vector<8x8xf32> to vector<1x8x8xf32>
      tpu.vector_store %arg11[%c1_109, %c0_110, %c0_111], %326 {strides = array<i32>} : memref<2x8x8xf32, #tpu.memory_space<vmem>>, vector<1x8x8xf32>,
    } else {
    }
    %c0 = arith.constant 0 : index
    %c0_1 = arith.constant 0 : index
    %c0_2 = arith.constant 0 : index
    %3 = vector.load %arg8[%c0, %c0_1, %c0_2] : memref<1x9x32xf32, #tpu.memory_space<vmem>>, vector<1x9x32xf32>
    %4 = vector.shape_cast %3 : vector<1x9x32xf32> to vector<9x32xf32>
    %5 = vector.extract_strided_slice %4 {offsets = [0, 0], sizes = [1, 32], strides = [1, 1]} : vector<9x32xf32> to vector<1x32xf32>
    %6 = vector.extract_strided_slice %4 {offsets = [1, 0], sizes = [1, 32], strides = [1, 1]} : vector<9x32xf32> to vector<1x32xf32>
    %7 = vector.extract_strided_slice %4 {offsets = [2, 0], sizes = [1, 32], strides = [1, 1]} : vector<9x32xf32> to vector<1x32xf32>
    %8 = vector.extract_strided_slice %4 {offsets = [3, 0], sizes = [1, 32], strides = [1, 1]} : vector<9x32xf32> to vector<1x32xf32>
    %9 = vector.extract_strided_slice %4 {offsets = [4, 0], sizes = [1, 32], strides = [1, 1]} : vector<9x32xf32> to vector<1x32xf32>
    %10 = vector.extract_strided_slice %4 {offsets = [5, 0], sizes = [1, 32], strides = [1, 1]} : vector<9x32xf32> to vector<1x32xf32>
    %11 = vector.extract_strided_slice %4 {offsets = [6, 0], sizes = [1, 32], strides = [1, 1]} : vector<9x32xf32> to vector<1x32xf32>
    %12 = vector.extract_strided_slice %4 {offsets = [7, 0], sizes = [1, 32], strides = [1, 1]} : vector<9x32xf32> to vector<1x32xf32>
    %13 = vector.extract_strided_slice %4 {offsets = [8, 0], sizes = [1, 32], strides = [1, 1]} : vector<9x32xf32> to vector<1x32xf32>
    %c0_3 = arith.constant 0 : index
    %c0_4 = arith.constant 0 : index
    %c0_5 = arith.constant 0 : index
    %14 = vector.load %arg9[%c0_3, %c0_4, %c0_5] : memref<1x1x64xf32, #tpu.memory_space<vmem>>, vector<1x1x64xf32>
    %15 = vector.shape_cast %14 : vector<1x1x64xf32> to vector<1x64xf32>
    %c0_6 = arith.constant 0 : index
    %c0_7 = arith.constant 0 : index
    %c0_8 = arith.constant 0 : index
    %16 = vector.load %arg10[%c0_6, %c0_7, %c0_8] : memref<2x8x32xf32, #tpu.memory_space<vmem>>, vector<2x8x32xf32>
    %17 = vector.shape_cast %16 : vector<2x8x32xf32> to vector<16x32xf32>
    %18 = arith.truncf %17 : vector<16x32xf32> to vector<16x32xbf16>
    %c0_9 = arith.constant 0 : index
    %c0_10 = arith.constant 0 : index
    %c0_11 = arith.constant 0 : index
    %19 = vector.load %arg4[%c0_9, %c0_10, %c0_11] : memref<1x32x96xbf16, #tpu.memory_space<vmem>>, vector<1x32x96xbf16>
    %20 = vector.shape_cast %19 : vector<1x32x96xbf16> to vector<32x96xbf16>
    %cst = arith.constant dense<0.000000e+00> : vector<16x96xf32>
    %21 = tpu.matmul %18, %20, %cst {dimension_numbers = #tpu.dot_dimension_numbers<[1], [0], [0], [1], [0, 0, 1, 1], [], []>} : vector<16x32xbf16>, vector<32x96xbf16>, vector<16x96xf32> -> vector<16x96xf32>
    %22 = vector.extract_strided_slice %21 {offsets = [0, 0], sizes = [16, 32], strides = [1, 1]} : vector<16x96xf32> to vector<16x32xf32>
    %23 = vector.broadcast %5 : vector<1x32xf32> to vector<16x32xf32>
    %24 = arith.addf %22, %23 : vector<16x32xf32>
    %25 = vector.extract_strided_slice %21 {offsets = [0, 32], sizes = [16, 32], strides = [1, 1]} : vector<16x96xf32> to vector<16x32xf32>
    %26 = vector.broadcast %6 : vector<1x32xf32> to vector<16x32xf32>
    %27 = arith.addf %25, %26 : vector<16x32xf32>
    %28 = vector.extract_strided_slice %21 {offsets = [0, 64], sizes = [16, 32], strides = [1, 1]} : vector<16x96xf32> to vector<16x32xf32>
    %29 = vector.broadcast %7 : vector<1x32xf32> to vector<16x32xf32>
    %30 = arith.addf %28, %29 : vector<16x32xf32>
    %c0_12 = arith.constant 0 : index
    %c0_13 = arith.constant 0 : index
    %c0_14 = arith.constant 0 : index
    %31 = vector.load %arg11[%c0_12, %c0_13, %c0_14] : memref<2x8x8xf32, #tpu.memory_space<vmem>>, vector<1x8x8xf32>
    %32 = vector.shape_cast %31 : vector<1x8x8xf32> to vector<8x8xf32>
    %33 = vector.extract_strided_slice %24 {offsets = [0, 0], sizes = [8, 8], strides = [1, 1]} : vector<16x32xf32> to vector<8x8xf32>
    %34 = arith.truncf %33 : vector<8x8xf32> to vector<8x8xbf16>
    %35 = vector.extract_strided_slice %27 {offsets = [0, 0], sizes = [8, 8], strides = [1, 1]} : vector<16x32xf32> to vector<8x8xf32>
    %36 = arith.truncf %35 : vector<8x8xf32> to vector<8x8xbf16>
    %37 = vector.extract_strided_slice %30 {offsets = [0, 0], sizes = [8, 8], strides = [1, 1]} : vector<16x32xf32> to vector<8x8xf32>
    %38 = arith.truncf %37 : vector<8x8xf32> to vector<8x8xbf16>
    "tpu.trace_start"() <{level = 10 : i32, message = "qd,kd->qk"}> : () -> ()
    %cst_15 = arith.constant dense<0.000000e+00> : vector<8x8xf32>
    %39 = tpu.matmul %34, %36, %cst_15 {dimension_numbers = #tpu.dot_dimension_numbers<[1], [1], [0], [0], [0, 0, 1, 0], [], []>} : vector<8x8xbf16>, vector<8x8xbf16>, vector<8x8xf32> -> vector<8x8xf32>
    %cst_16 = arith.constant 0.000000e+00 : f32
    "tpu.trace_stop"() : () -> ()
    %40 = vector.broadcast %cst_16 : f32 to vector<8x8xf32>
    %41 = arith.cmpf ogt, %32, %40 : vector<8x8xf32>
    %cst_17 = arith.constant -1.000000e+10 : f32
    %42 = vector.broadcast %cst_17 : f32 to vector<8x8xf32>
    %43 = arith.select %41, %39, %42 : vector<8x8xi1>, vector<8x8xf32>
    %cst_18 = arith.constant dense<0xFF800000> : vector<8xf32>
    %44 = vector.multi_reduction <maximumf>, %43, %cst_18 [1] : vector<8x8xf32> to vector<8xf32>
    %45 = vector.shape_cast %44 : vector<8xf32> to vector<8x1xf32>
    %46 = vector.broadcast %45 : vector<8x1xf32> to vector<8x8xf32>
    %47 = arith.subf %43, %46 : vector<8x8xf32>
    %48 = math.exp %47 : vector<8x8xf32>
    %cst_19 = arith.constant dense<0.000000e+00> : vector<8xf32>
    %49 = vector.multi_reduction <add>, %48, %cst_19 [1] : vector<8x8xf32> to vector<8xf32>
    %50 = vector.shape_cast %49 : vector<8xf32> to vector<8x1xf32>
    %51 = tpu.reciprocal %50 {approx = true} : vector<8x1xf32> -> vector<8x1xf32>
    %52 = vector.broadcast %51 : vector<8x1xf32> to vector<8x8xf32>
    %53 = arith.mulf %48, %52 : vector<8x8xf32>
    %54 = arith.truncf %53 : vector<8x8xf32> to vector<8x8xbf16>
    %cst_20 = arith.constant dense<0.000000e+00> : vector<8x8xf32>
    %55 = tpu.matmul %54, %38, %cst_20 {dimension_numbers = #tpu.dot_dimension_numbers<[1], [0], [0], [1], [0, 0, 1, 1], [], []>} : vector<8x8xbf16>, vector<8x8xbf16>, vector<8x8xf32> -> vector<8x8xf32>
    %56 = vector.extract_strided_slice %24 {offsets = [0, 8], sizes = [8, 8], strides = [1, 1]} : vector<16x32xf32> to vector<8x8xf32>
    %57 = arith.truncf %56 : vector<8x8xf32> to vector<8x8xbf16>
    %58 = vector.extract_strided_slice %27 {offsets = [0, 8], sizes = [8, 8], strides = [1, 1]} : vector<16x32xf32> to vector<8x8xf32>
    %59 = arith.truncf %58 : vector<8x8xf32> to vector<8x8xbf16>
    %60 = vector.extract_strided_slice %30 {offsets = [0, 8], sizes = [8, 8], strides = [1, 1]} : vector<16x32xf32> to vector<8x8xf32>
    %61 = arith.truncf %60 : vector<8x8xf32> to vector<8x8xbf16>
    "tpu.trace_start"() <{level = 10 : i32, message = "qd,kd->qk"}> : () -> ()
    %cst_21 = arith.constant dense<0.000000e+00> : vector<8x8xf32>
    %62 = tpu.matmul %57, %59, %cst_21 {dimension_numbers = #tpu.dot_dimension_numbers<[1], [1], [0], [0], [0, 0, 1, 0], [], []>} : vector<8x8xbf16>, vector<8x8xbf16>, vector<8x8xf32> -> vector<8x8xf32>
    %cst_22 = arith.constant 0.000000e+00 : f32
    "tpu.trace_stop"() : () -> ()
    %63 = vector.broadcast %cst_22 : f32 to vector<8x8xf32>
    %64 = arith.cmpf ogt, %32, %63 : vector<8x8xf32>
    %cst_23 = arith.constant -1.000000e+10 : f32
    %65 = vector.broadcast %cst_23 : f32 to vector<8x8xf32>
    %66 = arith.select %64, %62, %65 : vector<8x8xi1>, vector<8x8xf32>
    %cst_24 = arith.constant dense<0xFF800000> : vector<8xf32>
    %67 = vector.multi_reduction <maximumf>, %66, %cst_24 [1] : vector<8x8xf32> to vector<8xf32>
    %68 = vector.shape_cast %67 : vector<8xf32> to vector<8x1xf32>
    %69 = vector.broadcast %68 : vector<8x1xf32> to vector<8x8xf32>
    %70 = arith.subf %66, %69 : vector<8x8xf32>
    %71 = math.exp %70 : vector<8x8xf32>
    %cst_25 = arith.constant dense<0.000000e+00> : vector<8xf32>
    %72 = vector.multi_reduction <add>, %71, %cst_25 [1] : vector<8x8xf32> to vector<8xf32>
    %73 = vector.shape_cast %72 : vector<8xf32> to vector<8x1xf32>
    %74 = tpu.reciprocal %73 {approx = true} : vector<8x1xf32> -> vector<8x1xf32>
    %75 = vector.broadcast %74 : vector<8x1xf32> to vector<8x8xf32>
    %76 = arith.mulf %71, %75 : vector<8x8xf32>
    %77 = arith.truncf %76 : vector<8x8xf32> to vector<8x8xbf16>
    %cst_26 = arith.constant dense<0.000000e+00> : vector<8x8xf32>
    %78 = tpu.matmul %77, %61, %cst_26 {dimension_numbers = #tpu.dot_dimension_numbers<[1], [0], [0], [1], [0, 0, 1, 1], [], []>} : vector<8x8xbf16>, vector<8x8xbf16>, vector<8x8xf32> -> vector<8x8xf32>
    %79 = vector.extract_strided_slice %24 {offsets = [0, 16], sizes = [8, 8], strides = [1, 1]} : vector<16x32xf32> to vector<8x8xf32>
    %80 = arith.truncf %79 : vector<8x8xf32> to vector<8x8xbf16>
    %81 = vector.extract_strided_slice %27 {offsets = [0, 16], sizes = [8, 8], strides = [1, 1]} : vector<16x32xf32> to vector<8x8xf32>
    %82 = arith.truncf %81 : vector<8x8xf32> to vector<8x8xbf16>
    %83 = vector.extract_strided_slice %30 {offsets = [0, 16], sizes = [8, 8], strides = [1, 1]} : vector<16x32xf32> to vector<8x8xf32>
    %84 = arith.truncf %83 : vector<8x8xf32> to vector<8x8xbf16>
    "tpu.trace_start"() <{level = 10 : i32, message = "qd,kd->qk"}> : () -> ()
    %cst_27 = arith.constant dense<0.000000e+00> : vector<8x8xf32>
    %85 = tpu.matmul %80, %82, %cst_27 {dimension_numbers = #tpu.dot_dimension_numbers<[1], [1], [0], [0], [0, 0, 1, 0], [], []>} : vector<8x8xbf16>, vector<8x8xbf16>, vector<8x8xf32> -> vector<8x8xf32>
    %cst_28 = arith.constant 0.000000e+00 : f32
    "tpu.trace_stop"() : () -> ()
    %86 = vector.broadcast %cst_28 : f32 to vector<8x8xf32>
    %87 = arith.cmpf ogt, %32, %86 : vector<8x8xf32>
    %cst_29 = arith.constant -1.000000e+10 : f32
    %88 = vector.broadcast %cst_29 : f32 to vector<8x8xf32>
    %89 = arith.select %87, %85, %88 : vector<8x8xi1>, vector<8x8xf32>
    %cst_30 = arith.constant dense<0xFF800000> : vector<8xf32>
    %90 = vector.multi_reduction <maximumf>, %89, %cst_30 [1] : vector<8x8xf32> to vector<8xf32>
    %91 = vector.shape_cast %90 : vector<8xf32> to vector<8x1xf32>
    %92 = vector.broadcast %91 : vector<8x1xf32> to vector<8x8xf32>
    %93 = arith.subf %89, %92 : vector<8x8xf32>
    %94 = math.exp %93 : vector<8x8xf32>
    %cst_31 = arith.constant dense<0.000000e+00> : vector<8xf32>
    %95 = vector.multi_reduction <add>, %94, %cst_31 [1] : vector<8x8xf32> to vector<8xf32>
    %96 = vector.shape_cast %95 : vector<8xf32> to vector<8x1xf32>
    %97 = tpu.reciprocal %96 {approx = true} : vector<8x1xf32> -> vector<8x1xf32>
    %98 = vector.broadcast %97 : vector<8x1xf32> to vector<8x8xf32>
    %99 = arith.mulf %94, %98 : vector<8x8xf32>
    %100 = arith.truncf %99 : vector<8x8xf32> to vector<8x8xbf16>
    %cst_32 = arith.constant dense<0.000000e+00> : vector<8x8xf32>
    %101 = tpu.matmul %100, %84, %cst_32 {dimension_numbers = #tpu.dot_dimension_numbers<[1], [0], [0], [1], [0, 0, 1, 1], [], []>} : vector<8x8xbf16>, vector<8x8xbf16>, vector<8x8xf32> -> vector<8x8xf32>
    %102 = vector.extract_strided_slice %24 {offsets = [0, 24], sizes = [8, 8], strides = [1, 1]} : vector<16x32xf32> to vector<8x8xf32>
    %103 = arith.truncf %102 : vector<8x8xf32> to vector<8x8xbf16>
    %104 = vector.extract_strided_slice %27 {offsets = [0, 24], sizes = [8, 8], strides = [1, 1]} : vector<16x32xf32> to vector<8x8xf32>
    %105 = arith.truncf %104 : vector<8x8xf32> to vector<8x8xbf16>
    %106 = vector.extract_strided_slice %30 {offsets = [0, 24], sizes = [8, 8], strides = [1, 1]} : vector<16x32xf32> to vector<8x8xf32>
    %107 = arith.truncf %106 : vector<8x8xf32> to vector<8x8xbf16>
    "tpu.trace_start"() <{level = 10 : i32, message = "qd,kd->qk"}> : () -> ()
    %cst_33 = arith.constant dense<0.000000e+00> : vector<8x8xf32>
    %108 = tpu.matmul %103, %105, %cst_33 {dimension_numbers = #tpu.dot_dimension_numbers<[1], [1], [0], [0], [0, 0, 1, 0], [], []>} : vector<8x8xbf16>, vector<8x8xbf16>, vector<8x8xf32> -> vector<8x8xf32>
    %cst_34 = arith.constant 0.000000e+00 : f32
    "tpu.trace_stop"() : () -> ()
    %109 = vector.broadcast %cst_34 : f32 to vector<8x8xf32>
    %110 = arith.cmpf ogt, %32, %109 : vector<8x8xf32>
    %cst_35 = arith.constant -1.000000e+10 : f32
    %111 = vector.broadcast %cst_35 : f32 to vector<8x8xf32>
    %112 = arith.select %110, %108, %111 : vector<8x8xi1>, vector<8x8xf32>
    %cst_36 = arith.constant dense<0xFF800000> : vector<8xf32>
    %113 = vector.multi_reduction <maximumf>, %112, %cst_36 [1] : vector<8x8xf32> to vector<8xf32>
    %114 = vector.shape_cast %113 : vector<8xf32> to vector<8x1xf32>
    %115 = vector.broadcast %114 : vector<8x1xf32> to vector<8x8xf32>
    %116 = arith.subf %112, %115 : vector<8x8xf32>
    %117 = math.exp %116 : vector<8x8xf32>
    %cst_37 = arith.constant dense<0.000000e+00> : vector<8xf32>
    %118 = vector.multi_reduction <add>, %117, %cst_37 [1] : vector<8x8xf32> to vector<8xf32>
    %119 = vector.shape_cast %118 : vector<8xf32> to vector<8x1xf32>
    %120 = tpu.reciprocal %119 {approx = true} : vector<8x1xf32> -> vector<8x1xf32>
    %121 = vector.broadcast %120 : vector<8x1xf32> to vector<8x8xf32>
    %122 = arith.mulf %117, %121 : vector<8x8xf32>
    %123 = arith.truncf %122 : vector<8x8xf32> to vector<8x8xbf16>
    %cst_38 = arith.constant dense<0.000000e+00> : vector<8x8xf32>
    %124 = tpu.matmul %123, %107, %cst_38 {dimension_numbers = #tpu.dot_dimension_numbers<[1], [0], [0], [1], [0, 0, 1, 1], [], []>} : vector<8x8xbf16>, vector<8x8xbf16>, vector<8x8xf32> -> vector<8x8xf32>
    %125 = tpu.concatenate %55, %78, %101, %124 in 1 : vector<8x8xf32>, vector<8x8xf32>, vector<8x8xf32>, vector<8x8xf32> -> vector<8x32xf32>
    %c1 = arith.constant 1 : index
    %c0_39 = arith.constant 0 : index
    %c0_40 = arith.constant 0 : index
    %126 = vector.load %arg11[%c1, %c0_39, %c0_40] : memref<2x8x8xf32, #tpu.memory_space<vmem>>, vector<1x8x8xf32>
    %127 = vector.shape_cast %126 : vector<1x8x8xf32> to vector<8x8xf32>
    %128 = vector.extract_strided_slice %24 {offsets = [8, 0], sizes = [8, 8], strides = [1, 1]} : vector<16x32xf32> to vector<8x8xf32>
    %129 = arith.truncf %128 : vector<8x8xf32> to vector<8x8xbf16>
    %130 = vector.extract_strided_slice %27 {offsets = [8, 0], sizes = [8, 8], strides = [1, 1]} : vector<16x32xf32> to vector<8x8xf32>
    %131 = arith.truncf %130 : vector<8x8xf32> to vector<8x8xbf16>
    %132 = vector.extract_strided_slice %30 {offsets = [8, 0], sizes = [8, 8], strides = [1, 1]} : vector<16x32xf32> to vector<8x8xf32>
    %133 = arith.truncf %132 : vector<8x8xf32> to vector<8x8xbf16>
    "tpu.trace_start"() <{level = 10 : i32, message = "qd,kd->qk"}> : () -> ()
    %cst_41 = arith.constant dense<0.000000e+00> : vector<8x8xf32>
    %134 = tpu.matmul %129, %131, %cst_41 {dimension_numbers = #tpu.dot_dimension_numbers<[1], [1], [0], [0], [0, 0, 1, 0], [], []>} : vector<8x8xbf16>, vector<8x8xbf16>, vector<8x8xf32> -> vector<8x8xf32>
    %cst_42 = arith.constant 0.000000e+00 : f32
    "tpu.trace_stop"() : () -> ()
    %135 = vector.broadcast %cst_42 : f32 to vector<8x8xf32>
    %136 = arith.cmpf ogt, %127, %135 : vector<8x8xf32>
    %cst_43 = arith.constant -1.000000e+10 : f32
    %137 = vector.broadcast %cst_43 : f32 to vector<8x8xf32>
    %138 = arith.select %136, %134, %137 : vector<8x8xi1>, vector<8x8xf32>
    %cst_44 = arith.constant dense<0xFF800000> : vector<8xf32>
    %139 = vector.multi_reduction <maximumf>, %138, %cst_44 [1] : vector<8x8xf32> to vector<8xf32>
    %140 = vector.shape_cast %139 : vector<8xf32> to vector<8x1xf32>
    %141 = vector.broadcast %140 : vector<8x1xf32> to vector<8x8xf32>
    %142 = arith.subf %138, %141 : vector<8x8xf32>
    %143 = math.exp %142 : vector<8x8xf32>
    %cst_45 = arith.constant dense<0.000000e+00> : vector<8xf32>
    %144 = vector.multi_reduction <add>, %143, %cst_45 [1] : vector<8x8xf32> to vector<8xf32>
    %145 = vector.shape_cast %144 : vector<8xf32> to vector<8x1xf32>
    %146 = tpu.reciprocal %145 {approx = true} : vector<8x1xf32> -> vector<8x1xf32>
    %147 = vector.broadcast %146 : vector<8x1xf32> to vector<8x8xf32>
    %148 = arith.mulf %143, %147 : vector<8x8xf32>
    %149 = arith.truncf %148 : vector<8x8xf32> to vector<8x8xbf16>
    %cst_46 = arith.constant dense<0.000000e+00> : vector<8x8xf32>
    %150 = tpu.matmul %149, %133, %cst_46 {dimension_numbers = #tpu.dot_dimension_numbers<[1], [0], [0], [1], [0, 0, 1, 1], [], []>} : vector<8x8xbf16>, vector<8x8xbf16>, vector<8x8xf32> -> vector<8x8xf32>
    %151 = vector.extract_strided_slice %24 {offsets = [8, 8], sizes = [8, 8], strides = [1, 1]} : vector<16x32xf32> to vector<8x8xf32>
    %152 = arith.truncf %151 : vector<8x8xf32> to vector<8x8xbf16>
    %153 = vector.extract_strided_slice %27 {offsets = [8, 8], sizes = [8, 8], strides = [1, 1]} : vector<16x32xf32> to vector<8x8xf32>
    %154 = arith.truncf %153 : vector<8x8xf32> to vector<8x8xbf16>
    %155 = vector.extract_strided_slice %30 {offsets = [8, 8], sizes = [8, 8], strides = [1, 1]} : vector<16x32xf32> to vector<8x8xf32>
    %156 = arith.truncf %155 : vector<8x8xf32> to vector<8x8xbf16>
    "tpu.trace_start"() <{level = 10 : i32, message = "qd,kd->qk"}> : () -> ()
    %cst_47 = arith.constant dense<0.000000e+00> : vector<8x8xf32>
    %157 = tpu.matmul %152, %154, %cst_47 {dimension_numbers = #tpu.dot_dimension_numbers<[1], [1], [0], [0], [0, 0, 1, 0], [], []>} : vector<8x8xbf16>, vector<8x8xbf16>, vector<8x8xf32> -> vector<8x8xf32>
    %cst_48 = arith.constant 0.000000e+00 : f32
    "tpu.trace_stop"() : () -> ()
    %158 = vector.broadcast %cst_48 : f32 to vector<8x8xf32>
    %159 = arith.cmpf ogt, %127, %158 : vector<8x8xf32>
    %cst_49 = arith.constant -1.000000e+10 : f32
    %160 = vector.broadcast %cst_49 : f32 to vector<8x8xf32>
    %161 = arith.select %159, %157, %160 : vector<8x8xi1>, vector<8x8xf32>
    %cst_50 = arith.constant dense<0xFF800000> : vector<8xf32>
    %162 = vector.multi_reduction <maximumf>, %161, %cst_50 [1] : vector<8x8xf32> to vector<8xf32>
    %163 = vector.shape_cast %162 : vector<8xf32> to vector<8x1xf32>
    %164 = vector.broadcast %163 : vector<8x1xf32> to vector<8x8xf32>
    %165 = arith.subf %161, %164 : vector<8x8xf32>
    %166 = math.exp %165 : vector<8x8xf32>
    %cst_51 = arith.constant dense<0.000000e+00> : vector<8xf32>
    %167 = vector.multi_reduction <add>, %166, %cst_51 [1] : vector<8x8xf32> to vector<8xf32>
    %168 = vector.shape_cast %167 : vector<8xf32> to vector<8x1xf32>
    %169 = tpu.reciprocal %168 {approx = true} : vector<8x1xf32> -> vector<8x1xf32>
    %170 = vector.broadcast %169 : vector<8x1xf32> to vector<8x8xf32>
    %171 = arith.mulf %166, %170 : vector<8x8xf32>
    %172 = arith.truncf %171 : vector<8x8xf32> to vector<8x8xbf16>
    %cst_52 = arith.constant dense<0.000000e+00> : vector<8x8xf32>
    %173 = tpu.matmul %172, %156, %cst_52 {dimension_numbers = #tpu.dot_dimension_numbers<[1], [0], [0], [1], [0, 0, 1, 1], [], []>} : vector<8x8xbf16>, vector<8x8xbf16>, vector<8x8xf32> -> vector<8x8xf32>
    %174 = vector.extract_strided_slice %24 {offsets = [8, 16], sizes = [8, 8], strides = [1, 1]} : vector<16x32xf32> to vector<8x8xf32>
    %175 = arith.truncf %174 : vector<8x8xf32> to vector<8x8xbf16>
    %176 = vector.extract_strided_slice %27 {offsets = [8, 16], sizes = [8, 8], strides = [1, 1]} : vector<16x32xf32> to vector<8x8xf32>
    %177 = arith.truncf %176 : vector<8x8xf32> to vector<8x8xbf16>
    %178 = vector.extract_strided_slice %30 {offsets = [8, 16], sizes = [8, 8], strides = [1, 1]} : vector<16x32xf32> to vector<8x8xf32>
    %179 = arith.truncf %178 : vector<8x8xf32> to vector<8x8xbf16>
    "tpu.trace_start"() <{level = 10 : i32, message = "qd,kd->qk"}> : () -> ()
    %cst_53 = arith.constant dense<0.000000e+00> : vector<8x8xf32>
    %180 = tpu.matmul %175, %177, %cst_53 {dimension_numbers = #tpu.dot_dimension_numbers<[1], [1], [0], [0], [0, 0, 1, 0], [], []>} : vector<8x8xbf16>, vector<8x8xbf16>, vector<8x8xf32> -> vector<8x8xf32>
    %cst_54 = arith.constant 0.000000e+00 : f32
    "tpu.trace_stop"() : () -> ()
    %181 = vector.broadcast %cst_54 : f32 to vector<8x8xf32>
    %182 = arith.cmpf ogt, %127, %181 : vector<8x8xf32>
    %cst_55 = arith.constant -1.000000e+10 : f32
    %183 = vector.broadcast %cst_55 : f32 to vector<8x8xf32>
    %184 = arith.select %182, %180, %183 : vector<8x8xi1>, vector<8x8xf32>
    %cst_56 = arith.constant dense<0xFF800000> : vector<8xf32>
    %185 = vector.multi_reduction <maximumf>, %184, %cst_56 [1] : vector<8x8xf32> to vector<8xf32>
    %186 = vector.shape_cast %185 : vector<8xf32> to vector<8x1xf32>
    %187 = vector.broadcast %186 : vector<8x1xf32> to vector<8x8xf32>
    %188 = arith.subf %184, %187 : vector<8x8xf32>
    %189 = math.exp %188 : vector<8x8xf32>
    %cst_57 = arith.constant dense<0.000000e+00> : vector<8xf32>
    %190 = vector.multi_reduction <add>, %189, %cst_57 [1] : vector<8x8xf32> to vector<8xf32>
    %191 = vector.shape_cast %190 : vector<8xf32> to vector<8x1xf32>
    %192 = tpu.reciprocal %191 {approx = true} : vector<8x1xf32> -> vector<8x1xf32>
    %193 = vector.broadcast %192 : vector<8x1xf32> to vector<8x8xf32>
    %194 = arith.mulf %189, %193 : vector<8x8xf32>
    %195 = arith.truncf %194 : vector<8x8xf32> to vector<8x8xbf16>
    %cst_58 = arith.constant dense<0.000000e+00> : vector<8x8xf32>
    %196 = tpu.matmul %195, %179, %cst_58 {dimension_numbers = #tpu.dot_dimension_numbers<[1], [0], [0], [1], [0, 0, 1, 1], [], []>} : vector<8x8xbf16>, vector<8x8xbf16>, vector<8x8xf32> -> vector<8x8xf32>
    %197 = vector.extract_strided_slice %24 {offsets = [8, 24], sizes = [8, 8], strides = [1, 1]} : vector<16x32xf32> to vector<8x8xf32>
    %198 = arith.truncf %197 : vector<8x8xf32> to vector<8x8xbf16>
    %199 = vector.extract_strided_slice %27 {offsets = [8, 24], sizes = [8, 8], strides = [1, 1]} : vector<16x32xf32> to vector<8x8xf32>
    %200 = arith.truncf %199 : vector<8x8xf32> to vector<8x8xbf16>
    %201 = vector.extract_strided_slice %30 {offsets = [8, 24], sizes = [8, 8], strides = [1, 1]} : vector<16x32xf32> to vector<8x8xf32>
    %202 = arith.truncf %201 : vector<8x8xf32> to vector<8x8xbf16>
    "tpu.trace_start"() <{level = 10 : i32, message = "qd,kd->qk"}> : () -> ()
    %cst_59 = arith.constant dense<0.000000e+00> : vector<8x8xf32>
    %203 = tpu.matmul %198, %200, %cst_59 {dimension_numbers = #tpu.dot_dimension_numbers<[1], [1], [0], [0], [0, 0, 1, 0], [], []>} : vector<8x8xbf16>, vector<8x8xbf16>, vector<8x8xf32> -> vector<8x8xf32>
    %cst_60 = arith.constant 0.000000e+00 : f32
    "tpu.trace_stop"() : () -> ()
    %204 = vector.broadcast %cst_60 : f32 to vector<8x8xf32>
    %205 = arith.cmpf ogt, %127, %204 : vector<8x8xf32>
    %cst_61 = arith.constant -1.000000e+10 : f32
    %206 = vector.broadcast %cst_61 : f32 to vector<8x8xf32>
    %207 = arith.select %205, %203, %206 : vector<8x8xi1>, vector<8x8xf32>
    %cst_62 = arith.constant dense<0xFF800000> : vector<8xf32>
    %208 = vector.multi_reduction <maximumf>, %207, %cst_62 [1] : vector<8x8xf32> to vector<8xf32>
    %209 = vector.shape_cast %208 : vector<8xf32> to vector<8x1xf32>
    %210 = vector.broadcast %209 : vector<8x1xf32> to vector<8x8xf32>
    %211 = arith.subf %207, %210 : vector<8x8xf32>
    %212 = math.exp %211 : vector<8x8xf32>
    %cst_63 = arith.constant dense<0.000000e+00> : vector<8xf32>
    %213 = vector.multi_reduction <add>, %212, %cst_63 [1] : vector<8x8xf32> to vector<8xf32>
    %214 = vector.shape_cast %213 : vector<8xf32> to vector<8x1xf32>
    %215 = tpu.reciprocal %214 {approx = true} : vector<8x1xf32> -> vector<8x1xf32>
    %216 = vector.broadcast %215 : vector<8x1xf32> to vector<8x8xf32>
    %217 = arith.mulf %212, %216 : vector<8x8xf32>
    %218 = arith.truncf %217 : vector<8x8xf32> to vector<8x8xbf16>
    %cst_64 = arith.constant dense<0.000000e+00> : vector<8x8xf32>
    %219 = tpu.matmul %218, %202, %cst_64 {dimension_numbers = #tpu.dot_dimension_numbers<[1], [0], [0], [1], [0, 0, 1, 1], [], []>} : vector<8x8xbf16>, vector<8x8xbf16>, vector<8x8xf32> -> vector<8x8xf32>
    %220 = tpu.concatenate %150, %173, %196, %219 in 1 : vector<8x8xf32>, vector<8x8xf32>, vector<8x8xf32>, vector<8x8xf32> -> vector<8x32xf32>
    %221 = tpu.concatenate %125, %220 in 0 : vector<8x32xf32>, vector<8x32xf32> -> vector<16x32xf32>
    %222 = arith.truncf %221 : vector<16x32xf32> to vector<16x32xbf16>
    %c0_65 = arith.constant 0 : index
    %c0_66 = arith.constant 0 : index
    %c0_67 = arith.constant 0 : index
    %223 = vector.load %arg5[%c0_65, %c0_66, %c0_67] : memref<1x32x32xbf16, #tpu.memory_space<vmem>>, vector<1x32x32xbf16>
    %224 = vector.shape_cast %223 : vector<1x32x32xbf16> to vector<32x32xbf16>
    %cst_68 = arith.constant dense<0.000000e+00> : vector<16x32xf32>
    %225 = tpu.matmul %222, %224, %cst_68 {dimension_numbers = #tpu.dot_dimension_numbers<[1], [0], [0], [1], [0, 0, 1, 1], [], []>} : vector<16x32xbf16>, vector<32x32xbf16>, vector<16x32xf32> -> vector<16x32xf32>
    %226 = vector.broadcast %8 : vector<1x32xf32> to vector<16x32xf32>
    %227 = arith.addf %225, %226 : vector<16x32xf32>
    %228 = arith.addf %17, %227 : vector<16x32xf32>
    %cst_69 = arith.constant dense<0.000000e+00> : vector<16xf32>
    %229 = vector.multi_reduction <add>, %228, %cst_69 [1] : vector<16x32xf32> to vector<16xf32>
    %230 = vector.shape_cast %229 : vector<16xf32> to vector<16x1xf32>
    %cst_70 = arith.constant 3.200000e+01 : f32
    %231 = vector.broadcast %cst_70 : f32 to vector<16x1xf32>
    %232 = arith.divf %230, %231 : vector<16x1xf32>
    %233 = vector.broadcast %232 : vector<16x1xf32> to vector<16x32xf32>
    %234 = arith.subf %228, %233 : vector<16x32xf32>
    %235 = arith.mulf %234, %234 : vector<16x32xf32>
    %cst_71 = arith.constant dense<0.000000e+00> : vector<16xf32>
    %236 = vector.multi_reduction <add>, %235, %cst_71 [1] : vector<16x32xf32> to vector<16xf32>
    %237 = vector.shape_cast %236 : vector<16xf32> to vector<16x1xf32>
    %cst_72 = arith.constant 3.200000e+01 : f32
    %238 = vector.broadcast %cst_72 : f32 to vector<16x1xf32>
    %239 = arith.divf %237, %238 : vector<16x1xf32>
    %240 = vector.broadcast %232 : vector<16x1xf32> to vector<16x32xf32>
    %241 = arith.subf %228, %240 : vector<16x32xf32>
    %cst_73 = arith.constant 2.000000e-02 : f32
    %242 = vector.broadcast %cst_73 : f32 to vector<16x1xf32>
    %243 = arith.addf %239, %242 : vector<16x1xf32>
    %244 = math.rsqrt %243 : vector<16x1xf32>
    %245 = vector.broadcast %244 : vector<16x1xf32> to vector<16x32xf32>
    %246 = arith.mulf %241, %245 : vector<16x32xf32>
    %247 = vector.broadcast %9 : vector<1x32xf32> to vector<16x32xf32>
    %248 = arith.mulf %246, %247 : vector<16x32xf32>
    %249 = vector.broadcast %10 : vector<1x32xf32> to vector<16x32xf32>
    %250 = arith.addf %248, %249 : vector<16x32xf32>
    %251 = arith.truncf %250 : vector<16x32xf32> to vector<16x32xbf16>
    %c0_74 = arith.constant 0 : index
    %c0_75 = arith.constant 0 : index
    %c0_76 = arith.constant 0 : index
    %252 = vector.load %arg6[%c0_74, %c0_75, %c0_76] : memref<1x32x64xbf16, #tpu.memory_space<vmem>>, vector<1x32x64xbf16>
    %253 = vector.shape_cast %252 : vector<1x32x64xbf16> to vector<32x64xbf16>
    %cst_77 = arith.constant dense<0.000000e+00> : vector<16x64xf32>
    %254 = tpu.matmul %251, %253, %cst_77 {dimension_numbers = #tpu.dot_dimension_numbers<[1], [0], [0], [1], [0, 0, 1, 1], [], []>} : vector<16x32xbf16>, vector<32x64xbf16>, vector<16x64xf32> -> vector<16x64xf32>
    %255 = vector.broadcast %15 : vector<1x64xf32> to vector<16x64xf32>
    %256 = arith.addf %254, %255 : vector<16x64xf32>
    %cst_78 = arith.constant 5.000000e-01 : f32
    %257 = vector.broadcast %cst_78 : f32 to vector<16x64xf32>
    %258 = arith.mulf %257, %256 : vector<16x64xf32>
    %cst_79 = arith.constant 0.707106769 : f32
    %259 = vector.broadcast %cst_79 : f32 to vector<16x64xf32>
    %260 = arith.mulf %256, %259 : vector<16x64xf32>
    %261 = math.erf %260 : vector<16x64xf32>
    %cst_80 = arith.constant 1.000000e+00 : f32
    %262 = vector.broadcast %cst_80 : f32 to vector<16x64xf32>
    %263 = arith.addf %262, %261 : vector<16x64xf32>
    %264 = arith.mulf %258, %263 : vector<16x64xf32>
    %265 = arith.truncf %264 : vector<16x64xf32> to vector<16x64xbf16>
    %c0_81 = arith.constant 0 : index
    %c0_82 = arith.constant 0 : index
    %c0_83 = arith.constant 0 : index
    %266 = vector.load %arg7[%c0_81, %c0_82, %c0_83] : memref<1x64x32xbf16, #tpu.memory_space<vmem>>, vector<1x64x32xbf16>
    %267 = vector.shape_cast %266 : vector<1x64x32xbf16> to vector<64x32xbf16>
    %cst_84 = arith.constant dense<0.000000e+00> : vector<16x32xf32>
    %268 = tpu.matmul %265, %267, %cst_84 {dimension_numbers = #tpu.dot_dimension_numbers<[1], [0], [0], [1], [0, 0, 1, 1], [], []>} : vector<16x64xbf16>, vector<64x32xbf16>, vector<16x32xf32> -> vector<16x32xf32>
    %269 = vector.broadcast %11 : vector<1x32xf32> to vector<16x32xf32>
    %270 = arith.addf %268, %269 : vector<16x32xf32>
    %271 = arith.addf %250, %270 : vector<16x32xf32>
    %cst_85 = arith.constant dense<0.000000e+00> : vector<16xf32>
    %272 = vector.multi_reduction <add>, %271, %cst_85 [1] : vector<16x32xf32> to vector<16xf32>
    %273 = vector.shape_cast %272 : vector<16xf32> to vector<16x1xf32>
    %cst_86 = arith.constant 3.200000e+01 : f32
    %274 = vector.broadcast %cst_86 : f32 to vector<16x1xf32>
    %275 = arith.divf %273, %274 : vector<16x1xf32>
    %276 = vector.broadcast %275 : vector<16x1xf32> to vector<16x32xf32>
    %277 = arith.subf %271, %276 : vector<16x32xf32>
    %278 = arith.mulf %277, %277 : vector<16x32xf32>
    %cst_87 = arith.constant dense<0.000000e+00> : vector<16xf32>
    %279 = vector.multi_reduction <add>, %278, %cst_87 [1] : vector<16x32xf32> to vector<16xf32>
    %280 = vector.shape_cast %279 : vector<16xf32> to vector<16x1xf32>
    %cst_88 = arith.constant 3.200000e+01 : f32
    %281 = vector.broadcast %cst_88 : f32 to vector<16x1xf32>
    %282 = arith.divf %280, %281 : vector<16x1xf32>
    %283 = vector.broadcast %275 : vector<16x1xf32> to vector<16x32xf32>
    %284 = arith.subf %271, %283 : vector<16x32xf32>
    %cst_89 = arith.constant 2.000000e-02 : f32
    %285 = vector.broadcast %cst_89 : f32 to vector<16x1xf32>
    %286 = arith.addf %282, %285 : vector<16x1xf32>
    %287 = math.rsqrt %286 : vector<16x1xf32>
    %288 = vector.broadcast %287 : vector<16x1xf32> to vector<16x32xf32>
    %289 = arith.mulf %284, %288 : vector<16x32xf32>
    %290 = vector.broadcast %12 : vector<1x32xf32> to vector<16x32xf32>
    %291 = arith.mulf %289, %290 : vector<16x32xf32>
    %292 = vector.broadcast %13 : vector<1x32xf32> to vector<16x32xf32>
    %293 = arith.addf %291, %292 : vector<16x32xf32>
    %294 = vector.shape_cast %293 : vector<16x32xf32> to vector<2x8x32xf32>
    %c0_90 = arith.constant 0 : index
    %c0_91 = arith.constant 0 : index
    %c0_92 = arith.constant 0 : index
    %295 = vector.load %arg10[%c0_90, %c0_91, %c0_92] : memref<2x8x32xf32, #tpu.memory_space<vmem>>, vector<2x8x32xf32>
    tpu.vector_store %arg10[%c0_90, %c0_91, %c0_92], %294 {strides = array<i32>} : memref<2x8x32xf32, #tpu.memory_space<vmem>>, vector<2x8x32xf32>,
    return
  }
  func.func @transform_0(%arg0: i32, %arg1: i32) -> (i32, i32) {
    %c0_i32 = arith.constant 0 : i32
    %c0_i32_0 = arith.constant 0 : i32
    return %arg0, %c0_i32 : i32, i32
  }
  func.func @transform_1(%arg0: i32, %arg1: i32) -> (i32, i32, i32) {
    %c0_i32 = arith.constant 0 : i32
    %c0_i32_0 = arith.constant 0 : i32
    %c0_i32_1 = arith.constant 0 : i32
    return %arg0, %c0_i32, %c0_i32_0 : i32, i32, i32
  }
  func.func @transform_2(%arg0: i32, %arg1: i32) -> (i32, i32, i32) {
    %c0_i32 = arith.constant 0 : i32
    %c0_i32_0 = arith.constant 0 : i32
    %c0_i32_1 = arith.constant 0 : i32
    return %arg1, %c0_i32, %c0_i32_0 : i32, i32, i32
  }
  func.func @transform_3(%arg0: i32, %arg1: i32) -> (i32, i32, i32) {
    %c0_i32 = arith.constant 0 : i32
    %c0_i32_0 = arith.constant 0 : i32
    %c0_i32_1 = arith.constant 0 : i32
    return %arg1, %c0_i32, %c0_i32_0 : i32, i32, i32
  }
  func.func @transform_4(%arg0: i32, %arg1: i32) -> (i32, i32, i32) {
    %c0_i32 = arith.constant 0 : i32
    %c0_i32_0 = arith.constant 0 : i32
    %c0_i32_1 = arith.constant 0 : i32
    return %arg1, %c0_i32, %c0_i32_0 : i32, i32, i32
  }
  func.func @transform_5(%arg0: i32, %arg1: i32) -> (i32, i32, i32) {
    %c0_i32 = arith.constant 0 : i32
    %c0_i32_0 = arith.constant 0 : i32
    %c0_i32_1 = arith.constant 0 : i32
    return %arg1, %c0_i32, %c0_i32_0 : i32, i32, i32
  }
  func.func @transform_6(%arg0: i32, %arg1: i32) -> (i32, i32, i32) {
    %c0_i32 = arith.constant 0 : i32
    %c0_i32_0 = arith.constant 0 : i32
    %c0_i32_1 = arith.constant 0 : i32
    return %arg1, %c0_i32, %c0_i32_0 : i32, i32, i32
  }
  func.func @transform_7(%arg0: i32, %arg1: i32) -> (i32, i32, i32) {
    %c0_i32 = arith.constant 0 : i32
    %c0_i32_0 = arith.constant 0 : i32
    %c0_i32_1 = arith.constant 0 : i32
    return %arg1, %c0_i32, %c0_i32_0 : i32, i32, i32
  }
  func.func @transform_8(%arg0: i32, %arg1: i32) -> (i32, i32, i32) {
    %c0_i32 = arith.constant 0 : i32
    %c0_i32_0 = arith.constant 0 : i32
    %c0_i32_1 = arith.constant 0 : i32
    return %arg0, %c0_i32, %c0_i32_0 : i32, i32, i32
  }
}

</mosaic_0001>

<llo_original>
// kernel: tpu_custom_call.1
$region0: #{tpu_custom_call.1}
  #allocation0 [shape = 'u32[]', space=smem, size = 0x4, offset = 0x4, fixed_abs, tag = 'smem constant byte address 0x4 - core index']
  #allocation1 [shape = 'u32[144,128]{1,0:T(1,128)}', space=vmem, size = 0x12000, scoped, tag = 'internal scratch']
  #allocation2 [shape = 'f32[2,8,8]{2,1,0:T(8,128)}', space=vmem, size = 0x2000, scoped, tag = 'scratch operand']
  %s0 = inlined_call_operand.vmem [shape: s32[2,8], index: 0, kind: input, shape index: {}]
  %s1 = inlined_call_operand.vmem [shape: f32[2,8,32], index: 1, kind: input, shape index: {}]
  %s2 = inlined_call_operand.vmem [shape: bf16[2,32,96], index: 2, kind: input, shape index: {}]
  %s3 = inlined_call_operand.vmem [shape: bf16[2,32,32], index: 3, kind: input, shape index: {}]
  %s4 = inlined_call_operand.vmem [shape: bf16[2,32,64], index: 4, kind: input, shape index: {}]
  %s5 = inlined_call_operand.vmem [shape: bf16[2,64,32], index: 5, kind: input, shape index: {}]
  %s6 = inlined_call_operand.vmem [shape: f32[2,9,32], index: 6, kind: input, shape index: {}]
  %s7 = inlined_call_operand.vmem [shape: f32[2,1,64], index: 7, kind: input, shape index: {}]
  %s8 = inlined_call_operand.hbm [shape: f32[2,8,32], index: 8, kind: output, shape index: {}]
  %s9 = sld [smem:[#allocation0]]
  $region69: #{tpu_custom_call.1} parent=0
    _
  %s11 = ssub.s32 1, %s9
  %s12 = scalar_select 0, %s11, %s9
  $region1: #{tpu_custom_call.1} parent=0
    #allocation3 [shape = 'u8[8192]{0}', space=vmem, size = 0x2000, scoped, tag = 'output window, operand 0, single buffered']
    #allocation4 [shape = 's32[2]{0}', space=sflag, size = 0x8, scoped, tag = 'scoped memory for tpu_custom_call.1']
    %13 = vsyncpa [#allocation4], 0
    loop: start=0, step=1, limit=4
    $region2: #{tpu_custom_call.1} parent=1 // loop_pre_header
      _
    $region3: #{tpu_custom_call.1} parent=1 // loop_header
      %s15 = sphi 0, %s19
      %p16 = scmp.ge.s32.totalorder %s15, 4
      %s22 = sphi 0, %s34
      %s23 = sphi 0, %s30
      %s24 = sphi 0, %s22
      %s25 = sphi 0, %s23
      %s26 = sphi 0, %s24
      %s27 = sphi 0, %s25
      %s37 = sphi 0, %s39
      %s40 = sphi 0, %s37
      %s41 = sphi 0, %s40
      %s57 = sphi 0, %s41
      %s63 = sphi 0, %s65
      %s66 = sphi 0, %s63
      %s67 = sphi 0, %s66
      %s83 = sphi 0, %s67
      %s89 = sphi 0, %s91
      %s92 = sphi 0, %s89
      %s93 = sphi 0, %s92
      %s109 = sphi 0, %s93
      %s115 = sphi 0, %s117
      %s118 = sphi 0, %s115
      %s119 = sphi 0, %s118
      %s135 = sphi 0, %s119
      %s141 = sphi 0, %s143
      %s144 = sphi 0, %s141
      %s145 = sphi 0, %s144
      %s161 = sphi 0, %s145
      %s167 = sphi 0, %s169
      %s170 = sphi 0, %s167
      %s171 = sphi 0, %s170
      %s187 = sphi 0, %s171
      %s193 = sphi 0, %s195
      %s196 = sphi 0, %s193
      %s197 = sphi 0, %s196
      %s213 = sphi 0, %s197
      %s219 = sphi 0, %s221
      %s222 = sphi 0, %s219
      %s223 = sphi 0, %s222
      %s239 = sphi 0, %s223
      %s245 = sphi 0, %s247
      %s248 = sphi 0, %s245
      %s249 = sphi 0, %s248
      %s265 = sphi 0, %s249
    $region4: #{tpu_custom_call.1} parent=1 // loop_header_branch
      %18 = sbr.rel (%p16) target = $region8
    $region5: #{tpu_custom_call.1} parent=1 // loop_body
      %s20 = ssub.s32 %s15, 1
      %s21 = ssub.s32 %s15, 2
      %s28 = sadd.s32 1, %s23
      %p29 = scmp.ge.s32.totalorder %s28, 2
      %s30 = scalar_select %p29, 0, %s28
      %s31 = sadd.s32 1, %s22
      %s32 = scalar_select %p29, %s31, %s22
      %p33 = scmp.ge.s32.totalorder %s32, 1
      %s34 = scalar_select %p33, 0, %s32
      %s35 = ssub.s32 %s22, %s34
      %p36 = scmp.eq.s32.totalorder %s35, 0
      %s38 = sadd.s32 %s37, 1
      %s39 = scalar_select %p36, %s37, %s38
      %p42 = pneg %p36
      %p43 = scmp.eq.s32.totalorder %s15, 1
      %p44 = por %p42, %p43
      %p45 = scmp.ne.s32.totalorder %s37, %s40
      %p46 = scmp.eq.s32.totalorder %s15, 0
      %p47 = por %p45, %p46
      %p48 = scmp.ne.s32.totalorder %s37, %s40
      %p49 = scmp.eq.s32.totalorder %s20, 1
      %p50 = por %p48, %p49
      %p51 = scmp.ne.s32.totalorder %s40, %s41
      %p52 = scmp.eq.s32.totalorder %s20, 0
      %p53 = por %p51, %p52
      %p54 = scmp.ne.s32.totalorder %s40, %s41
      %p55 = scmp.eq.s32.totalorder %s21, 1
      %p56 = por %p54, %p55
      %p58 = scmp.ne.s32.totalorder %s41, %s57
      %p59 = scmp.eq.s32.totalorder %s21, 0
      %p60 = por %p58, %p59
      %s61 = ssub.s32 %s22, %s34
      %p62 = scmp.eq.s32.totalorder %s61, 0
      %s64 = sadd.s32 %s63, 1
      %s65 = scalar_select %p62, %s63, %s64
      %p68 = pneg %p62
      %p69 = scmp.eq.s32.totalorder %s15, 1
      %p70 = por %p68, %p69
      %p71 = scmp.ne.s32.totalorder %s63, %s66
      %p72 = scmp.eq.s32.totalorder %s15, 0
      %p73 = por %p71, %p72
      %p74 = scmp.ne.s32.totalorder %s63, %s66
      %p75 = scmp.eq.s32.totalorder %s20, 1
      %p76 = por %p74, %p75
      %p77 = scmp.ne.s32.totalorder %s66, %s67
      %p78 = scmp.eq.s32.totalorder %s20, 0
      %p79 = por %p77, %p78
      %p80 = scmp.ne.s32.totalorder %s66, %s67
      %p81 = scmp.eq.s32.totalorder %s21, 1
      %p82 = por %p80, %p81
      %p84 = scmp.ne.s32.totalorder %s67, %s83
      %p85 = scmp.eq.s32.totalorder %s21, 0
      %p86 = por %p84, %p85
      %s87 = ssub.s32 %s23, %s30
      %p88 = scmp.eq.s32.totalorder %s87, 0
      %s90 = sadd.s32 %s89, 1
      %s91 = scalar_select %p88, %s89, %s90
      %p94 = pneg %p88
      %p95 = scmp.eq.s32.totalorder %s15, 1
      %p96 = por %p94, %p95
      %p97 = scmp.ne.s32.totalorder %s89, %s92
      %p98 = scmp.eq.s32.totalorder %s15, 0
      %p99 = por %p97, %p98
      %p100 = scmp.ne.s32.totalorder %s89, %s92
      %p101 = scmp.eq.s32.totalorder %s20, 1
      %p102 = por %p100, %p101
      %p103 = scmp.ne.s32.totalorder %s92, %s93
      %p104 = scmp.eq.s32.totalorder %s20, 0
      %p105 = por %p103, %p104
      %p106 = scmp.ne.s32.totalorder %s92, %s93
      %p107 = scmp.eq.s32.totalorder %s21, 1
      %p108 = por %p106, %p107
      %p110 = scmp.ne.s32.totalorder %s93, %s109
      %p111 = scmp.eq.s32.totalorder %s21, 0
      %p112 = por %p110, %p111
      %s113 = ssub.s32 %s23, %s30
      %p114 = scmp.eq.s32.totalorder %s113, 0
      %s116 = sadd.s32 %s115, 1
      %s117 = scalar_select %p114, %s115, %s116
      %p120 = pneg %p114
      %p121 = scmp.eq.s32.totalorder %s15, 1
      %p122 = por %p120, %p121
      %p123 = scmp.ne.s32.totalorder %s115, %s118
      %p124 = scmp.eq.s32.totalorder %s15, 0
      %p125 = por %p123, %p124
      %p126 = scmp.ne.s32.totalorder %s115, %s118
      %p127 = scmp.eq.s32.totalorder %s20, 1
      %p128 = por %p126, %p127
      %p129 = scmp.ne.s32.totalorder %s118, %s119
      %p130 = scmp.eq.s32.totalorder %s20, 0
      %p131 = por %p129, %p130
      %p132 = scmp.ne.s32.totalorder %s118, %s119
      %p133 = scmp.eq.s32.totalorder %s21, 1
      %p134 = por %p132, %p133
      %p136 = scmp.ne.s32.totalorder %s119, %s135
      %p137 = scmp.eq.s32.totalorder %s21, 0
      %p138 = por %p136, %p137
      %s139 = ssub.s32 %s23, %s30
      %p140 = scmp.eq.s32.totalorder %s139, 0
      %s142 = sadd.s32 %s141, 1
      %s143 = scalar_select %p140, %s141, %s142
      %p146 = pneg %p140
      %p147 = scmp.eq.s32.totalorder %s15, 1
      %p148 = por %p146, %p147
      %p149 = scmp.ne.s32.totalorder %s141, %s144
      %p150 = scmp.eq.s32.totalorder %s15, 0
      %p151 = por %p149, %p150
      %p152 = scmp.ne.s32.totalorder %s141, %s144
      %p153 = scmp.eq.s32.totalorder %s20, 1
      %p154 = por %p152, %p153
      %p155 = scmp.ne.s32.totalorder %s144, %s145
      %p156 = scmp.eq.s32.totalorder %s20, 0
      %p157 = por %p155, %p156
      %p158 = scmp.ne.s32.totalorder %s144, %s145
      %p159 = scmp.eq.s32.totalorder %s21, 1
      %p160 = por %p158, %p159
      %p162 = scmp.ne.s32.totalorder %s145, %s161
      %p163 = scmp.eq.s32.totalorder %s21, 0
      %p164 = por %p162, %p163
      %s165 = ssub.s32 %s23, %s30
      %p166 = scmp.eq.s32.totalorder %s165, 0
      %s168 = sadd.s32 %s167, 1
      %s169 = scalar_select %p166, %s167, %s168
      %p172 = pneg %p166
      %p173 = scmp.eq.s32.totalorder %s15, 1
      %p174 = por %p172, %p173
      %p175 = scmp.ne.s32.totalorder %s167, %s170
      %p176 = scmp.eq.s32.totalorder %s15, 0
      %p177 = por %p175, %p176
      %p178 = scmp.ne.s32.totalorder %s167, %s170
      %p179 = scmp.eq.s32.totalorder %s20, 1
      %p180 = por %p178, %p179
      %p181 = scmp.ne.s32.totalorder %s170, %s171
      %p182 = scmp.eq.s32.totalorder %s20, 0
      %p183 = por %p181, %p182
      %p184 = scmp.ne.s32.totalorder %s170, %s171
      %p185 = scmp.eq.s32.totalorder %s21, 1
      %p186 = por %p184, %p185
      %p188 = scmp.ne.s32.totalorder %s171, %s187
      %p189 = scmp.eq.s32.totalorder %s21, 0
      %p190 = por %p188, %p189
      %s191 = ssub.s32 %s23, %s30
      %p192 = scmp.eq.s32.totalorder %s191, 0
      %s194 = sadd.s32 %s193, 1
      %s195 = scalar_select %p192, %s193, %s194
      %p198 = pneg %p192
      %p199 = scmp.eq.s32.totalorder %s15, 1
      %p200 = por %p198, %p199
      %p201 = scmp.ne.s32.totalorder %s193, %s196
      %p202 = scmp.eq.s32.totalorder %s15, 0
      %p203 = por %p201, %p202
      %p204 = scmp.ne.s32.totalorder %s193, %s196
      %p205 = scmp.eq.s32.totalorder %s20, 1
      %p206 = por %p204, %p205
      %p207 = scmp.ne.s32.totalorder %s196, %s197
      %p208 = scmp.eq.s32.totalorder %s20, 0
      %p209 = por %p207, %p208
      %p210 = scmp.ne.s32.totalorder %s196, %s197
      %p211 = scmp.eq.s32.totalorder %s21, 1
      %p212 = por %p210, %p211
      %p214 = scmp.ne.s32.totalorder %s197, %s213
      %p215 = scmp.eq.s32.totalorder %s21, 0
      %p216 = por %p214, %p215
      %s217 = ssub.s32 %s23, %s30
      %p218 = scmp.eq.s32.totalorder %s217, 0
      %s220 = sadd.s32 %s219, 1
      %s221 = scalar_select %p218, %s219, %s220
      %p224 = pneg %p218
      %p225 = scmp.eq.s32.totalorder %s15, 1
      %p226 = por %p224, %p225
      %p227 = scmp.ne.s32.totalorder %s219, %s222
      %p228 = scmp.eq.s32.totalorder %s15, 0
      %p229 = por %p227, %p228
      %p230 = scmp.ne.s32.totalorder %s219, %s222
      %p231 = scmp.eq.s32.totalorder %s20, 1
      %p232 = por %p230, %p231
      %p233 = scmp.ne.s32.totalorder %s222, %s223
      %p234 = scmp.eq.s32.totalorder %s20, 0
      %p235 = por %p233, %p234
      %p236 = scmp.ne.s32.totalorder %s222, %s223
      %p237 = scmp.eq.s32.totalorder %s21, 1
      %p238 = por %p236, %p237
      %p240 = scmp.ne.s32.totalorder %s223, %s239
      %p241 = scmp.eq.s32.totalorder %s21, 0
      %p242 = por %p240, %p241
      %s243 = ssub.s32 %s22, %s34
      %p244 = scmp.eq.s32.totalorder %s243, 0
      %s246 = sadd.s32 %s245, 1
      %s247 = scalar_select %p244, %s245, %s246
      %p250 = pneg %p244
      %p251 = scmp.eq.s32.totalorder %s15, 1
      %p252 = por %p250, %p251
      %p253 = scmp.ne.s32.totalorder %s245, %s248
      %p254 = scmp.eq.s32.totalorder %s15, 0
      %p255 = por %p253, %p254
      %p256 = scmp.ne.s32.totalorder %s245, %s248
      %p257 = scmp.eq.s32.totalorder %s20, 1
      %p258 = por %p256, %p257
      %p259 = scmp.ne.s32.totalorder %s248, %s249
      %p260 = scmp.eq.s32.totalorder %s20, 0
      %p261 = por %p259, %p260
      %p262 = scmp.ne.s32.totalorder %s248, %s249
      %p263 = scmp.eq.s32.totalorder %s21, 1
      %p264 = por %p262, %p263
      %p266 = scmp.ne.s32.totalorder %s249, %s265
      %p267 = scmp.eq.s32.totalorder %s21, 0
      %p268 = por %p266, %p267
      %p269 = scmp.le.s32.totalorder 1, %s15
      %p270 = scmp.lt.s32.totalorder %s15, 3
      %p271 = pnand %p269, %p270
      %p272 = pneg %p271
      // Predicated region
      $region9: #{tpu_custom_call.1} parent=5 // pred_check
        _
      $region10: #{tpu_custom_call.1} parent=5 // pred_check_branch
        %274 = sbr.rel (%p271) target = $region12
      $region11: #{tpu_custom_call.1} parent=5 // pred_region
        %s275 = ssub.s32 %s15, 1
        // Predicated region
        $region13: #{tpu_custom_call.1} parent=11 // pred_check
          %p276 = pneg %p53
        $region14: #{tpu_custom_call.1} parent=11 // pred_check_branch
          %278 = sbr.rel (%p276) target = $region16
        $region15: #{tpu_custom_call.1} parent=11 // pred_region
          %p279 = scmp.lt.s32.totalorder %s24, 0
          %s280 = scalar_select %p279, %s24, 0
          %s281 = smul.addr %s280, 2
          %s282 = scalar_lea.vmem %s0, %s281
        $region16: #{tpu_custom_call.1} parent=11 // pred_fallthru
          _
        // Predicated region
        $region17: #{tpu_custom_call.1} parent=11 // pred_check
          %p283 = pneg %p79
        $region18: #{tpu_custom_call.1} parent=11 // pred_check_branch
          %285 = sbr.rel (%p283) target = $region20
        $region19: #{tpu_custom_call.1} parent=11 // pred_region
          %s286 = smul.u32 2, %s24
          %p287 = scmp.lt.s32.totalorder %s286, 1
          %s288 = scalar_select %p287, %s286, 1
          %s289 = smul.addr %s288, 8
          %s290 = scalar_lea.vmem %s1, %s289
          %s291 = smul.u32 2, %s24
        $region20: #{tpu_custom_call.1} parent=11 // pred_fallthru
          _
      $region12: #{tpu_custom_call.1} parent=5 // pred_fallthru
        _
      %p292 = scmp.lt.s32.totalorder %s15, 2
      // Predicated region
      $region21: #{tpu_custom_call.1} parent=5 // pred_check
        %p293 = pneg %p292
      $region22: #{tpu_custom_call.1} parent=5 // pred_check_branch
        %295 = sbr.rel (%p293) target = $region24
      $region23: #{tpu_custom_call.1} parent=5 // pred_region
        // Predicated region
        $region25: #{tpu_custom_call.1} parent=23 // pred_check
          %p296 = pneg %p99
        $region26: #{tpu_custom_call.1} parent=23 // pred_check_branch
          %298 = sbr.rel (%p296) target = $region28
        $region27: #{tpu_custom_call.1} parent=23 // pred_region
          %p299 = scmp.lt.s32.totalorder %s23, 1
          %s300 = scalar_select %p299, %s23, 1
          %s301 = smul.addr %s300, 4
          %s302 = smul.addr %s301, 4
          %s303 = scalar_lea.vmem %s2, %s302
        $region28: #{tpu_custom_call.1} parent=23 // pred_fallthru
          _
        // Predicated region
        $region29: #{tpu_custom_call.1} parent=23 // pred_check
          %p304 = pneg %p125
        $region30: #{tpu_custom_call.1} parent=23 // pred_check_branch
          %306 = sbr.rel (%p304) target = $region32
        $region31: #{tpu_custom_call.1} parent=23 // pred_region
          %p307 = scmp.lt.s32.totalorder %s23, 1
          %s308 = scalar_select %p307, %s23, 1
          %s309 = smul.addr %s308, 4
          %s310 = smul.addr %s309, 4
          %s311 = scalar_lea.vmem %s3, %s310
        $region32: #{tpu_custom_call.1} parent=23 // pred_fallthru
          _
        // Predicated region
        $region33: #{tpu_custom_call.1} parent=23 // pred_check
          %p312 = pneg %p151
        $region34: #{tpu_custom_call.1} parent=23 // pred_check_branch
          %314 = sbr.rel (%p312) target = $region36
        $region35: #{tpu_custom_call.1} parent=23 // pred_region
          %p315 = scmp.lt.s32.totalorder %s23, 1
          %s316 = scalar_select %p315, %s23, 1
          %s317 = smul.addr %s316, 4
          %s318 = smul.addr %s317, 4
          %s319 = scalar_lea.vmem %s4, %s318
        $region36: #{tpu_custom_call.1} parent=23 // pred_fallthru
          _
        // Predicated region
        $region37: #{tpu_custom_call.1} parent=23 // pred_check
          %p320 = pneg %p177
        $region38: #{tpu_custom_call.1} parent=23 // pred_check_branch
          %322 = sbr.rel (%p320) target = $region40
        $region39: #{tpu_custom_call.1} parent=23 // pred_region
          %p323 = scmp.lt.s32.totalorder %s23, 1
          %s324 = scalar_select %p323, %s23, 1
          %s325 = smul.addr %s324, 8
          %s326 = smul.addr %s325, 4
          %s327 = scalar_lea.vmem %s5, %s326
        $region40: #{tpu_custom_call.1} parent=23 // pred_fallthru
          _
        // Predicated region
        $region41: #{tpu_custom_call.1} parent=23 // pred_check
          %p328 = pneg %p203
        $region42: #{tpu_custom_call.1} parent=23 // pred_check_branch
          %330 = sbr.rel (%p328) target = $region44
        $region43: #{tpu_custom_call.1} parent=23 // pred_region
          %p331 = scmp.lt.s32.totalorder %s23, 1
          %s332 = scalar_select %p331, %s23, 1
          %s333 = smul.addr %s332, 2
          %s334 = smul.addr %s333, 8
          %s335 = scalar_lea.vmem %s6, %s334
        $region44: #{tpu_custom_call.1} parent=23 // pred_fallthru
          _
        // Predicated region
        $region45: #{tpu_custom_call.1} parent=23 // pred_check
          %p336 = pneg %p229
        $region46: #{tpu_custom_call.1} parent=23 // pred_check_branch
          %338 = sbr.rel (%p336) target = $region48
        $region47: #{tpu_custom_call.1} parent=23 // pred_region
          %p339 = scmp.lt.s32.totalorder %s23, 1
          %s340 = scalar_select %p339, %s23, 1
          %s341 = scalar_lea.vmem %s7, %s340
        $region48: #{tpu_custom_call.1} parent=23 // pred_fallthru
          _
      $region24: #{tpu_custom_call.1} parent=5 // pred_fallthru
        _
      %p342 = scmp.le.s32.totalorder 1, %s15
      %p343 = scmp.lt.s32.totalorder %s15, 3
      %p344 = pnand %p342, %p343
      %p345 = pneg %p344
      // Predicated region
      $region49: #{tpu_custom_call.1} parent=5 // pred_check
        _
      $region50: #{tpu_custom_call.1} parent=5 // pred_check_branch
        %347 = sbr.rel (%p344) target = $region52
      $region51: #{tpu_custom_call.1} parent=5 // pred_region
        %s348 = ssub.s32 %s15, 1
        %p349 = scmp.lt.s32.totalorder %s24, 0
        %s350 = scalar_select %p349, %s24, 0
        %s351 = smul.addr %s350, 2
        %s352 = scalar_lea.vmem %s0, %s351
        %p353 = pneg %p53
        %p354 = pneg %p50
        %s355 = smul.u32 2, %s24
        %p356 = scmp.lt.s32.totalorder %s355, 1
        %s357 = scalar_select %p356, %s355, 1
        %s358 = smul.addr %s357, 8
        %s359 = scalar_lea.vmem %s1, %s358
        %p360 = pneg %p79
        %p361 = pneg %p76
        %p362 = scmp.lt.s32.totalorder %s25, 1
        %s363 = scalar_select %p362, %s25, 1
        %s364 = smul.addr %s363, 4
        %s365 = smul.addr %s364, 4
        %s366 = scalar_lea.vmem %s2, %s365
        %p367 = pneg %p105
        %p368 = pneg %p102
        %p369 = scmp.lt.s32.totalorder %s25, 1
        %s370 = scalar_select %p369, %s25, 1
        %s371 = smul.addr %s370, 4
        %s372 = smul.addr %s371, 4
        %s373 = scalar_lea.vmem %s3, %s372
        %p374 = pneg %p131
        %p375 = pneg %p128
        %p376 = scmp.lt.s32.totalorder %s25, 1
        %s377 = scalar_select %p376, %s25, 1
        %s378 = smul.addr %s377, 4
        %s379 = smul.addr %s378, 4
        %s380 = scalar_lea.vmem %s4, %s379
        %p381 = pneg %p157
        %p382 = pneg %p154
        %p383 = scmp.lt.s32.totalorder %s25, 1
        %s384 = scalar_select %p383, %s25, 1
        %s385 = smul.addr %s384, 8
        %s386 = smul.addr %s385, 4
        %s387 = scalar_lea.vmem %s5, %s386
        %p388 = pneg %p183
        %p389 = pneg %p180
        %p390 = scmp.lt.s32.totalorder %s25, 1
        %s391 = scalar_select %p390, %s25, 1
        %s392 = smul.addr %s391, 2
        %s393 = smul.addr %s392, 8
        %s394 = scalar_lea.vmem %s6, %s393
        %p395 = pneg %p209
        %p396 = pneg %p206
        %p397 = scmp.lt.s32.totalorder %s25, 1
        %s398 = scalar_select %p397, %s25, 1
        %s399 = scalar_lea.vmem %s7, %s398
        %p400 = pneg %p235
        %p401 = pneg %p232
        %p402 = pneg %p261
        %p403 = pneg %p258
        %p404 = scmp.lt.s32.totalorder %s24, 0
        %s405 = scalar_select %p404, %s24, 0
        %s406 = smul.addr %s405, 2
        %s407 = scalar_lea.vmem %s0, %s406
        %s408 = smul.u32 2, %s24
        %p409 = scmp.lt.s32.totalorder %s408, 1
        %s410 = scalar_select %p409, %s408, 1
        %s411 = smul.addr %s410, 8
        %s412 = scalar_lea.vmem %s1, %s411
        %s413 = smul.u32 2, %s24
        %p414 = scmp.lt.s32.totalorder %s25, 1
        %s415 = scalar_select %p414, %s25, 1
        %s416 = smul.addr %s415, 4
        %s417 = smul.addr %s416, 4
        %s418 = scalar_lea.vmem %s2, %s417
        %p419 = scmp.lt.s32.totalorder %s25, 1
        %s420 = scalar_select %p419, %s25, 1
        %s421 = smul.addr %s420, 4
        %s422 = smul.addr %s421, 4
        %s423 = scalar_lea.vmem %s3, %s422
        %p424 = scmp.lt.s32.totalorder %s25, 1
        %s425 = scalar_select %p424, %s25, 1
        %s426 = smul.addr %s425, 4
        %s427 = smul.addr %s426, 4
        %s428 = scalar_lea.vmem %s4, %s427
        %p429 = scmp.lt.s32.totalorder %s25, 1
        %s430 = scalar_select %p429, %s25, 1
        %s431 = smul.addr %s430, 8
        %s432 = smul.addr %s431, 4
        %s433 = scalar_lea.vmem %s5, %s432
        %p434 = scmp.lt.s32.totalorder %s25, 1
        %s435 = scalar_select %p434, %s25, 1
        %s436 = smul.addr %s435, 2
        %s437 = smul.addr %s436, 8
        %s438 = scalar_lea.vmem %s6, %s437
        %p439 = scmp.lt.s32.totalorder %s25, 1
        %s440 = scalar_select %p439, %s25, 1
        %s441 = scalar_lea.vmem %s7, %s440
        %s442 = smul.u32 2, %s24
        %p444 = scmp.eq.s32.totalorder %s25, 0
        // Predicated region
        $region53: #{tpu_custom_call.1} parent=51 // pred_check
          %p445 = pneg %p444
        $region54: #{tpu_custom_call.1} parent=51 // pred_check_branch
          %447 = sbr.rel (%p445) target = $region56
        $region55: #{tpu_custom_call.1} parent=51 // pred_region
          %v448 = vld [vmem:[%s412] sm:$0xff]
          %v449 = vld [vmem:[%s412 + $0x8] sm:$0xff]
          %vm450 = vcmask 261120
          %451 = vst.msk [vmem:[#allocation3] sm:$0xff] %vm450, %v448
          %452 = vst.msk [vmem:[#allocation3 + $0x8] sm:$0xff] %vm450, %v449
          %v453 = vld [vmem:[%s407] sm:$0x3]
          %vm454 = vcmp.ne.s32.totalorder %v453, 0
          %v455 = vsel %vm454, 1, 0
          %vm456 = vcmp.eq.s32.totalorder %v455, 1
          %v457 = vlaneseq
          %v458 = vshrl.u32 %v457, 7
          %v459 = vlaneseq
          %v460 = vand.u32 %v459, 127
          %vm461 = vcmp.ge.s32.totalorder %v458, %v460
          %v462 = vsel %vm461, 1, 0
          %v463 = vrot.slane %v462, 1
          %v464 = vrot.slane %v462, 2
          %v465 = vrot.slane %v462, 3
          %v466 = vrot.slane %v462, 4
          %v467 = vrot.slane %v462, 5
          %v468 = vrot.slane %v462, 6
          %v469 = vrot.slane %v462, 7
          %vm470 = vcmp.ne.s32.totalorder %v462, 0
          %vm471 = vcmp.ne.s32.totalorder %v463, 0
          %vm472 = vcmp.ne.s32.totalorder %v464, 0
          %vm473 = vcmp.ne.s32.totalorder %v465, 0
          %vm474 = vcmp.ne.s32.totalorder %v466, 0
          %vm475 = vcmp.ne.s32.totalorder %v467, 0
          %vm476 = vcmp.ne.s32.totalorder %v468, 0
          %vm477 = vcmp.ne.s32.totalorder %v469, 0
          %vm478 = vmand %vm456, %vm470
          %vm479 = vmand %vm456, %vm471
          %vm480 = vmand %vm456, %vm472
          %vm481 = vmand %vm456, %vm473
          %vm482 = vmand %vm456, %vm474
          %vm483 = vmand %vm456, %vm475
          %vm484 = vmand %vm456, %vm476
          %vm485 = vmand %vm456, %vm477
          %v486 = vsel %vm478, 1.0, 0.0
          %v487 = vsel %vm479, 1.0, 0.0
          %v488 = vsel %vm480, 1.0, 0.0
          %v489 = vsel %vm481, 1.0, 0.0
          %v490 = vsel %vm482, 1.0, 0.0
          %v491 = vsel %vm483, 1.0, 0.0
          %v492 = vsel %vm484, 1.0, 0.0
          %v493 = vsel %vm485, 1.0, 0.0
          %v502 = vrot.slane %v487, 7
          %vm503 = vcmask 1041409
          %v504 = vsel %vm503, %v502, %v486
          %v505 = vrot.slane %v488, 6
          %vm506 = vcmask 1042434
          %v507 = vsel %vm506, %v505, %v504
          %v508 = vrot.slane %v489, 5
          %vm509 = vcmask 1043459
          %v510 = vsel %vm509, %v508, %v507
          %v511 = vrot.slane %v490, 4
          %vm512 = vcmask 1044484
          %v513 = vsel %vm512, %v511, %v510
          %v514 = vrot.slane %v491, 3
          %vm515 = vcmask 1045509
          %v516 = vsel %vm515, %v514, %v513
          %v517 = vrot.slane %v492, 2
          %vm518 = vcmask 1046534
          %v519 = vsel %vm518, %v517, %v516
          %v520 = vrot.slane %v493, 1
          %vm521 = vcmask 1047559
          %v522 = vsel %vm521, %v520, %v519
          %vm524 = vcmask 64512
          %525 = vst.msk [vmem:[#allocation2] sm:$0xff] %vm524, %v522
          %v526 = vrot.slane %v486, 7
          %v527 = vsel %vm506, %v526, %v493
          %v528 = vrot.slane %v487, 6
          %v529 = vsel %vm509, %v528, %v527
          %v530 = vrot.slane %v488, 5
          %v531 = vsel %vm512, %v530, %v529
          %v532 = vrot.slane %v489, 4
          %v533 = vsel %vm515, %v532, %v531
          %v534 = vrot.slane %v490, 3
          %v535 = vsel %vm518, %v534, %v533
          %v536 = vrot.slane %v491, 2
          %v537 = vsel %vm521, %v536, %v535
          %v538 = vrot.slane %v492, 1
          %s541 = scalar_lea.vmem [#allocation2], 8
          %vm542 = vcmask 64513
          %543 = vst.msk [vmem:[%s541 - $0x1] sm:$0xfe] %vm542, %v537
          %vm544 = vcmask 57344
          %545 = vst.msk [vmem:[%s541 + $0x7] sm:$0x1] %vm544, %v538
        $region56: #{tpu_custom_call.1} parent=51 // pred_fallthru
          _
        %v546 = vld [vmem:[%s438] sm:$0xff]
        %v547 = vld [vmem:[%s438 + $0x8] sm:$0x1]
        %v548 = vld [vmem:[%s441] sm:$0x1]
        %v549 = vld [vmem:[#allocation3] sm:$0xff]
        %v550 = vld [vmem:[#allocation3 + $0x8] sm:$0xff]
        %v551 = vpack.c.bf16 %v550, %v549
        %v552 = vld [vmem:[%s418] sm:$0xf]
        %v553 = vld [vmem:[%s418 + $0x4] sm:$0xf]
        %v554 = vld [vmem:[%s418 + $0x8] sm:$0xf]
        %v555 = vld [vmem:[%s418 + $0xc] sm:$0xf]
        %v560 = vunpack.c.l.b16 %v552
        %v561 = vunpack.c.l.b16 %v553
        %v562 = vunpack.c.l.b16 %v554
        %v563 = vunpack.c.l.b16 %v555
        %v564 = vpack.c.b16 %v561, %v560
        %v565 = vpack.c.b16 %v563, %v562
        %vm568 = vcmask 261120
        %v570 = vsel %vm568, %v551, 0
        %572 = vmatprep.subr.bf16.mxu0 0
        %573 = vmatpush1.bf16.msra.mxu0 0
        %574 = vmatprep.subr.bf16.mxu0 0
        %575 = vmatpush1.bf16.msra.mxu0 0
        %576 = vmatprep.subr.bf16.mxu0 0
        %577 = vmatpush1.bf16.msra.mxu0 0
        %578 = vmatprep.subr.bf16.mxu0 0
        %579 = vmatpush1.bf16.msra.mxu0 0
        %580 = vmatprep.subr.bf16.mxu0 0
        %581 = vmatpush1.bf16.msra.mxu0 0
        %582 = vmatprep.subr.bf16.mxu0 0
        %583 = vmatpush1.bf16.msra.mxu0 0
        %584 = vmatprep.subr.bf16.mxu0 0
        %585 = vmatpush1.bf16.msra.mxu0 %v565
        %586 = vmatprep.subr.bf16.mxu0 0
        %587 = vmatpush1.bf16.msra.mxu0 %v564
        %588 = vmatprep.subr.bf16.mxu0 0
        %589 = vmatpush2.bf16.msra.mxu0 0
        %590 = vmatprep.subr.bf16.mxu0 0
        %591 = vmatpush2.bf16.msra.mxu0 0
        %592 = vmatprep.subr.bf16.mxu0 0
        %593 = vmatpush2.bf16.msra.mxu0 0
        %594 = vmatprep.subr.bf16.mxu0 0
        %595 = vmatpush2.bf16.msra.mxu0 0
        %596 = vmatprep.subr.bf16.mxu0 0
        %597 = vmatpush2.bf16.msra.mxu0 0
        %598 = vmatprep.subr.bf16.mxu0 0
        %599 = vmatpush2.bf16.msra.mxu0 0
        %600 = vmatprep.subr.bf16.mxu0 0
        %601 = vmatpush2.bf16.msra.mxu0 0
        %602 = vmatprep.subr.bf16.mxu0 0
        %603 = vmatpush2.bf16.msra.mxu0 0
        %604 = vmatprep.mubr.bf16.mxu0 0
        %605 = vmatmul.mubr.bf16.gmra.mxu0 %v570
        %v606 = vpop.f32.mrf.mxu0
        %v607 = vadd.f32 0.0, %v606
        %v608 = vpop.f32.mrf.mxu0
        %v609 = vpop.f32.mrf.mxu0
        %v610 = vadd.f32 0.0, %v609
        %v611 = vpop.f32.mrf.mxu0
        %612 = vdwg.mxu0
        %v613 = vlaneseq
        %v614 = vshrl.u32 %v613, 7
        %v615 = vsub.s32 0, %v614
        %v616 = vrot.slane %v546, %v615
        %v617 = vadd.f32 %v607, %v616
        %v618 = vadd.f32 %v610, %v616
        %v619 = vlaneseq
        %v620 = vshrl.u32 %v619, 7
        %v621 = vsub.s32 1, %v620
        %v622 = vrot.slane %v546, %v621
        %624 = vrot.lane.b32.xlu0 %v622, 32
        %v625 = vpop.permute.xlu0 %624
        %v627 = vadd.f32 %v607, %v625
        %v628 = vadd.f32 %v610, %v625
        %v629 = vlaneseq
        %v630 = vshrl.u32 %v629, 7
        %v631 = vsub.s32 2, %v630
        %v632 = vrot.slane %v546, %v631
        %634 = vrot.lane.b32.xlu0 %v632, 64
        %v635 = vpop.permute.xlu0 %634
        %v637 = vadd.f32 %v607, %v635
        %v638 = vadd.f32 %v610, %v635
        %v639 = vld [vmem:[#allocation2] sm:$0xff]
        %v640 = vpack.c.bf16 %v617, %v617
        %v641 = vpack.c.bf16 %v627, %v627
        %v642 = vpack.c.bf16 %v637, %v637
        %644 = vrot.lane.b32.xlu0 %v641, 96
        %v645 = vpop.permute.xlu0 %644
        %vm646 = vcmask 64512
        %v648 = vsel %vm646, %v640, 0
        %v651 = vsel %vm646, %v645, 0
        %653 = vmatprep.subr.bf16.mxu0 0
        %654 = vmatpush1.bf16.xpose.msra.mxu0 0
        %655 = vmatprep.subr.bf16.mxu0 0
        %656 = vmatpush1.bf16.xpose.msra.mxu0 0
        %657 = vmatprep.subr.bf16.mxu0 0
        %658 = vmatpush1.bf16.xpose.msra.mxu0 0
        %659 = vmatprep.subr.bf16.mxu0 0
        %660 = vmatpush1.bf16.xpose.msra.mxu0 0
        %661 = vmatprep.subr.bf16.mxu0 0
        %662 = vmatpush1.bf16.xpose.msra.mxu0 0
        %663 = vmatprep.subr.bf16.mxu0 0
        %664 = vmatpush1.bf16.xpose.msra.mxu0 0
        %665 = vmatprep.subr.bf16.mxu0 0
        %666 = vmatpush1.bf16.xpose.msra.mxu0 0
        %667 = vmatprep.subr.bf16.mxu0 0
        %668 = vmatpush1.bf16.xpose.msra.mxu0 %v651
        %669 = vmatprep.subr.bf16.mxu0 0
        %670 = vmatpush2.bf16.xpose.msra.mxu0 0
        %671 = vmatprep.subr.bf16.mxu0 0
        %672 = vmatpush2.bf16.xpose.msra.mxu0 0
        %673 = vmatprep.subr.bf16.mxu0 0
        %674 = vmatpush2.bf16.xpose.msra.mxu0 0
        %675 = vmatprep.subr.bf16.mxu0 0
        %676 = vmatpush2.bf16.xpose.msra.mxu0 0
        %677 = vmatprep.subr.bf16.mxu0 0
        %678 = vmatpush2.bf16.xpose.msra.mxu0 0
        %679 = vmatprep.subr.bf16.mxu0 0
        %680 = vmatpush2.bf16.xpose.msra.mxu0 0
        %681 = vmatprep.subr.bf16.mxu0 0
        %682 = vmatpush2.bf16.xpose.msra.mxu0 0
        %683 = vmatprep.subr.bf16.mxu0 0
        %684 = vmatpush2.bf16.xpose.msra.mxu0 0
        %685 = vmatprep.mubr.bf16.mxu0 0
        %686 = vmatmul.mubr.bf16.gmra.mxu0 %v648
        %v687 = vpop.f32.mrf.mxu0
        %v688 = vadd.f32 0.0, %v687
        %v689 = vpop.f32.mrf.mxu0
        %v690 = vpop.f32.mrf.mxu0
        %v691 = vpop.f32.mrf.mxu0
        %692 = vdwg.mxu0
        %vm693 = vcmp.gt.f32.partialorder %v639, 0.0
        %v694 = vsel %vm693, %v688, -1e+10
        %v695 = vsel %vm646, %v694, -inf
        %696 = vmax.xlane.f32.xlu0 %v695
        %v697 = vpop.xlane.xlu0 %696
        %v698 = vsub.f32 %v694, %v697
        %v699 = vmul.f32 %v698, 1.442695
        %v700 = vpow.pop %v699
        %v701 = vsel %vm646, %v700, 0.0
        %702 = vadd.xlane.f32.xlu0 %v701
        %v703 = vpop.xlane.xlu0 %702
        %v704 = vrcp.pop %v703
        %v705 = vmul.f32 %v700, %v704
        %v706 = vpack.c.bf16 %v705, %v705
        %708 = vrot.lane.b32.xlu0 %v642, 64
        %v709 = vpop.permute.xlu0 %708
        %v711 = vsel %vm646, %v706, 0
        %vm713 = vcmask 1043456
        %v715 = vsel %vm713, %v709, 0
        %717 = vmatprep.subr.bf16.mxu0 0
        %718 = vmatpush1.bf16.msra.mxu0 0
        %719 = vmatprep.subr.bf16.mxu0 0
        %720 = vmatpush1.bf16.msra.mxu0 0
        %721 = vmatprep.subr.bf16.mxu0 0
        %722 = vmatpush1.bf16.msra.mxu0 0
        %723 = vmatprep.subr.bf16.mxu0 0
        %724 = vmatpush1.bf16.msra.mxu0 0
        %725 = vmatprep.subr.bf16.mxu0 0
        %726 = vmatpush1.bf16.msra.mxu0 0
        %727 = vmatprep.subr.bf16.mxu0 0
        %728 = vmatpush1.bf16.msra.mxu0 0
        %729 = vmatprep.subr.bf16.mxu0 0
        %730 = vmatpush1.bf16.msra.mxu0 0
        %731 = vmatprep.subr.bf16.mxu0 0
        %732 = vmatpush1.bf16.msra.mxu0 %v715
        %733 = vmatprep.subr.bf16.mxu0 0
        %734 = vmatpush2.bf16.msra.mxu0 0
        %735 = vmatprep.subr.bf16.mxu0 0
        %736 = vmatpush2.bf16.msra.mxu0 0
        %737 = vmatprep.subr.bf16.mxu0 0
        %738 = vmatpush2.bf16.msra.mxu0 0
        %739 = vmatprep.subr.bf16.mxu0 0
        %740 = vmatpush2.bf16.msra.mxu0 0
        %741 = vmatprep.subr.bf16.mxu0 0
        %742 = vmatpush2.bf16.msra.mxu0 0
        %743 = vmatprep.subr.bf16.mxu0 0
        %744 = vmatpush2.bf16.msra.mxu0 0
        %745 = vmatprep.subr.bf16.mxu0 0
        %746 = vmatpush2.bf16.msra.mxu0 0
        %747 = vmatprep.subr.bf16.mxu0 0
        %748 = vmatpush2.bf16.msra.mxu0 0
        %749 = vmatprep.mubr.bf16.mxu0 0
        %750 = vmatmul.mubr.bf16.gmra.mxu0 %v711
        %v751 = vpop.f32.mrf.mxu0
        %v752 = vadd.f32 0.0, %v751
        %v753 = vpop.f32.mrf.mxu0
        %v754 = vpop.f32.mrf.mxu0
        %v755 = vpop.f32.mrf.mxu0
        %756 = vdwg.mxu0
        %758 = vrot.lane.b32.xlu0 %v640, 120
        %v759 = vpop.permute.xlu0 %758
        %760 = vrot.lane.b32.xlu0 %v641, 88
        %v761 = vpop.permute.xlu0 %760
        %v763 = vsel %vm646, %v759, 0
        %v766 = vsel %vm646, %v761, 0
        %768 = vmatprep.subr.bf16.mxu0 0
        %769 = vmatpush1.bf16.xpose.msra.mxu0 0
        %770 = vmatprep.subr.bf16.mxu0 0
        %771 = vmatpush1.bf16.xpose.msra.mxu0 0
        %772 = vmatprep.subr.bf16.mxu0 0
        %773 = vmatpush1.bf16.xpose.msra.mxu0 0
        %774 = vmatprep.subr.bf16.mxu0 0
        %775 = vmatpush1.bf16.xpose.msra.mxu0 0
        %776 = vmatprep.subr.bf16.mxu0 0
        %777 = vmatpush1.bf16.xpose.msra.mxu0 0
        %778 = vmatprep.subr.bf16.mxu0 0
        %779 = vmatpush1.bf16.xpose.msra.mxu0 0
        %780 = vmatprep.subr.bf16.mxu0 0
        %781 = vmatpush1.bf16.xpose.msra.mxu0 0
        %782 = vmatprep.subr.bf16.mxu0 0
        %783 = vmatpush1.bf16.xpose.msra.mxu0 %v766
        %784 = vmatprep.subr.bf16.mxu0 0
        %785 = vmatpush2.bf16.xpose.msra.mxu0 0
        %786 = vmatprep.subr.bf16.mxu0 0
        %787 = vmatpush2.bf16.xpose.msra.mxu0 0
        %788 = vmatprep.subr.bf16.mxu0 0
        %789 = vmatpush2.bf16.xpose.msra.mxu0 0
        %790 = vmatprep.subr.bf16.mxu0 0
        %791 = vmatpush2.bf16.xpose.msra.mxu0 0
        %792 = vmatprep.subr.bf16.mxu0 0
        %793 = vmatpush2.bf16.xpose.msra.mxu0 0
        %794 = vmatprep.subr.bf16.mxu0 0
        %795 = vmatpush2.bf16.xpose.msra.mxu0 0
        %796 = vmatprep.subr.bf16.mxu0 0
        %797 = vmatpush2.bf16.xpose.msra.mxu0 0
        %798 = vmatprep.subr.bf16.mxu0 0
        %799 = vmatpush2.bf16.xpose.msra.mxu0 0
        %800 = vmatprep.mubr.bf16.mxu0 0
        %801 = vmatmul.mubr.bf16.gmra.mxu0 %v763
        %v802 = vpop.f32.mrf.mxu0
        %v803 = vadd.f32 0.0, %v802
        %v804 = vpop.f32.mrf.mxu0
        %v805 = vpop.f32.mrf.mxu0
        %v806 = vpop.f32.mrf.mxu0
        %807 = vdwg.mxu0
        %v808 = vsel %vm693, %v803, -1e+10
        %v809 = vsel %vm646, %v808, -inf
        %810 = vmax.xlane.f32.xlu0 %v809
        %v811 = vpop.xlane.xlu0 %810
        %v812 = vsub.f32 %v808, %v811
        %v813 = vmul.f32 %v812, 1.442695
        %v814 = vpow.pop %v813
        %v815 = vsel %vm646, %v814, 0.0
        %816 = vadd.xlane.f32.xlu0 %v815
        %v817 = vpop.xlane.xlu0 %816
        %v818 = vrcp.pop %v817
        %v819 = vmul.f32 %v814, %v818
        %v820 = vpack.c.bf16 %v819, %v819
        %821 = vrot.lane.b32.xlu0 %v642, 56
        %v822 = vpop.permute.xlu0 %821
        %v824 = vsel %vm646, %v820, 0
        %v827 = vsel %vm713, %v822, 0
        %829 = vmatprep.subr.bf16.mxu0 0
        %830 = vmatpush1.bf16.msra.mxu0 0
        %831 = vmatprep.subr.bf16.mxu0 0
        %832 = vmatpush1.bf16.msra.mxu0 0
        %833 = vmatprep.subr.bf16.mxu0 0
        %834 = vmatpush1.bf16.msra.mxu0 0
        %835 = vmatprep.subr.bf16.mxu0 0
        %836 = vmatpush1.bf16.msra.mxu0 0
        %837 = vmatprep.subr.bf16.mxu0 0
        %838 = vmatpush1.bf16.msra.mxu0 0
        %839 = vmatprep.subr.bf16.mxu0 0
        %840 = vmatpush1.bf16.msra.mxu0 0
        %841 = vmatprep.subr.bf16.mxu0 0
        %842 = vmatpush1.bf16.msra.mxu0 0
        %843 = vmatprep.subr.bf16.mxu0 0
        %844 = vmatpush1.bf16.msra.mxu0 %v827
        %845 = vmatprep.subr.bf16.mxu0 0
        %846 = vmatpush2.bf16.msra.mxu0 0
        %847 = vmatprep.subr.bf16.mxu0 0
        %848 = vmatpush2.bf16.msra.mxu0 0
        %849 = vmatprep.subr.bf16.mxu0 0
        %850 = vmatpush2.bf16.msra.mxu0 0
        %851 = vmatprep.subr.bf16.mxu0 0
        %852 = vmatpush2.bf16.msra.mxu0 0
        %853 = vmatprep.subr.bf16.mxu0 0
        %854 = vmatpush2.bf16.msra.mxu0 0
        %855 = vmatprep.subr.bf16.mxu0 0
        %856 = vmatpush2.bf16.msra.mxu0 0
        %857 = vmatprep.subr.bf16.mxu0 0
        %858 = vmatpush2.bf16.msra.mxu0 0
        %859 = vmatprep.subr.bf16.mxu0 0
        %860 = vmatpush2.bf16.msra.mxu0 0
        %861 = vmatprep.mubr.bf16.mxu0 0
        %862 = vmatmul.mubr.bf16.gmra.mxu0 %v824
        %v863 = vpop.f32.mrf.mxu0
        %v864 = vadd.f32 0.0, %v863
        %v865 = vpop.f32.mrf.mxu0
        %v866 = vpop.f32.mrf.mxu0
        %v867 = vpop.f32.mrf.mxu0
        %868 = vdwg.mxu0
        %869 = vrot.lane.b32.xlu0 %v640, 112
        %v870 = vpop.permute.xlu0 %869
        %871 = vrot.lane.b32.xlu0 %v641, 80
        %v872 = vpop.permute.xlu0 %871
        %v874 = vsel %vm646, %v870, 0
        %v877 = vsel %vm646, %v872, 0
        %879 = vmatprep.subr.bf16.mxu0 0
        %880 = vmatpush1.bf16.xpose.msra.mxu0 0
        %881 = vmatprep.subr.bf16.mxu0 0
        %882 = vmatpush1.bf16.xpose.msra.mxu0 0
        %883 = vmatprep.subr.bf16.mxu0 0
        %884 = vmatpush1.bf16.xpose.msra.mxu0 0
        %885 = vmatprep.subr.bf16.mxu0 0
        %886 = vmatpush1.bf16.xpose.msra.mxu0 0
        %887 = vmatprep.subr.bf16.mxu0 0
        %888 = vmatpush1.bf16.xpose.msra.mxu0 0
        %889 = vmatprep.subr.bf16.mxu0 0
        %890 = vmatpush1.bf16.xpose.msra.mxu0 0
        %891 = vmatprep.subr.bf16.mxu0 0
        %892 = vmatpush1.bf16.xpose.msra.mxu0 0
        %893 = vmatprep.subr.bf16.mxu0 0
        %894 = vmatpush1.bf16.xpose.msra.mxu0 %v877
        %895 = vmatprep.subr.bf16.mxu0 0
        %896 = vmatpush2.bf16.xpose.msra.mxu0 0
        %897 = vmatprep.subr.bf16.mxu0 0
        %898 = vmatpush2.bf16.xpose.msra.mxu0 0
        %899 = vmatprep.subr.bf16.mxu0 0
        %900 = vmatpush2.bf16.xpose.msra.mxu0 0
        %901 = vmatprep.subr.bf16.mxu0 0
        %902 = vmatpush2.bf16.xpose.msra.mxu0 0
        %903 = vmatprep.subr.bf16.mxu0 0
        %904 = vmatpush2.bf16.xpose.msra.mxu0 0
        %905 = vmatprep.subr.bf16.mxu0 0
        %906 = vmatpush2.bf16.xpose.msra.mxu0 0
        %907 = vmatprep.subr.bf16.mxu0 0
        %908 = vmatpush2.bf16.xpose.msra.mxu0 0
        %909 = vmatprep.subr.bf16.mxu0 0
        %910 = vmatpush2.bf16.xpose.msra.mxu0 0
        %911 = vmatprep.mubr.bf16.mxu0 0
        %912 = vmatmul.mubr.bf16.gmra.mxu0 %v874
        %v913 = vpop.f32.mrf.mxu0
        %v914 = vadd.f32 0.0, %v913
        %v915 = vpop.f32.mrf.mxu0
        %v916 = vpop.f32.mrf.mxu0
        %v917 = vpop.f32.mrf.mxu0
        %918 = vdwg.mxu0
        %v919 = vsel %vm693, %v914, -1e+10
        %v920 = vsel %vm646, %v919, -inf
        %921 = vmax.xlane.f32.xlu0 %v920
        %v922 = vpop.xlane.xlu0 %921
        %v923 = vsub.f32 %v919, %v922
        %v924 = vmul.f32 %v923, 1.442695
        %v925 = vpow.pop %v924
        %v926 = vsel %vm646, %v925, 0.0
        %927 = vadd.xlane.f32.xlu0 %v926
        %v928 = vpop.xlane.xlu0 %927
        %v929 = vrcp.pop %v928
        %v930 = vmul.f32 %v925, %v929
        %v931 = vpack.c.bf16 %v930, %v930
        %932 = vrot.lane.b32.xlu0 %v642, 48
        %v933 = vpop.permute.xlu0 %932
        %v935 = vsel %vm646, %v931, 0
        %v938 = vsel %vm713, %v933, 0
        %940 = vmatprep.subr.bf16.mxu0 0
        %941 = vmatpush1.bf16.msra.mxu0 0
        %942 = vmatprep.subr.bf16.mxu0 0
        %943 = vmatpush1.bf16.msra.mxu0 0
        %944 = vmatprep.subr.bf16.mxu0 0
        %945 = vmatpush1.bf16.msra.mxu0 0
        %946 = vmatprep.subr.bf16.mxu0 0
        %947 = vmatpush1.bf16.msra.mxu0 0
        %948 = vmatprep.subr.bf16.mxu0 0
        %949 = vmatpush1.bf16.msra.mxu0 0
        %950 = vmatprep.subr.bf16.mxu0 0
        %951 = vmatpush1.bf16.msra.mxu0 0
        %952 = vmatprep.subr.bf16.mxu0 0
        %953 = vmatpush1.bf16.msra.mxu0 0
        %954 = vmatprep.subr.bf16.mxu0 0
        %955 = vmatpush1.bf16.msra.mxu0 %v938
        %956 = vmatprep.subr.bf16.mxu0 0
        %957 = vmatpush2.bf16.msra.mxu0 0
        %958 = vmatprep.subr.bf16.mxu0 0
        %959 = vmatpush2.bf16.msra.mxu0 0
        %960 = vmatprep.subr.bf16.mxu0 0
        %961 = vmatpush2.bf16.msra.mxu0 0
        %962 = vmatprep.subr.bf16.mxu0 0
        %963 = vmatpush2.bf16.msra.mxu0 0
        %964 = vmatprep.subr.bf16.mxu0 0
        %965 = vmatpush2.bf16.msra.mxu0 0
        %966 = vmatprep.subr.bf16.mxu0 0
        %967 = vmatpush2.bf16.msra.mxu0 0
        %968 = vmatprep.subr.bf16.mxu0 0
        %969 = vmatpush2.bf16.msra.mxu0 0
        %970 = vmatprep.subr.bf16.mxu0 0
        %971 = vmatpush2.bf16.msra.mxu0 0
        %972 = vmatprep.mubr.bf16.mxu0 0
        %973 = vmatmul.mubr.bf16.gmra.mxu0 %v935
        %v974 = vpop.f32.mrf.mxu0
        %v975 = vadd.f32 0.0, %v974
        %v976 = vpop.f32.mrf.mxu0
        %v977 = vpop.f32.mrf.mxu0
        %v978 = vpop.f32.mrf.mxu0
        %979 = vdwg.mxu0
        %980 = vrot.lane.b32.xlu0 %v640, 104
        %v981 = vpop.permute.xlu0 %980
        %982 = vrot.lane.b32.xlu0 %v641, 72
        %v983 = vpop.permute.xlu0 %982
        %v985 = vsel %vm646, %v981, 0
        %v988 = vsel %vm646, %v983, 0
        %990 = vmatprep.subr.bf16.mxu0 0
        %991 = vmatpush1.bf16.xpose.msra.mxu0 0
        %992 = vmatprep.subr.bf16.mxu0 0
        %993 = vmatpush1.bf16.xpose.msra.mxu0 0
        %994 = vmatprep.subr.bf16.mxu0 0
        %995 = vmatpush1.bf16.xpose.msra.mxu0 0
        %996 = vmatprep.subr.bf16.mxu0 0
        %997 = vmatpush1.bf16.xpose.msra.mxu0 0
        %998 = vmatprep.subr.bf16.mxu0 0
        %999 = vmatpush1.bf16.xpose.msra.mxu0 0
        %1000 = vmatprep.subr.bf16.mxu0 0
        %1001 = vmatpush1.bf16.xpose.msra.mxu0 0
        %1002 = vmatprep.subr.bf16.mxu0 0
        %1003 = vmatpush1.bf16.xpose.msra.mxu0 0
        %1004 = vmatprep.subr.bf16.mxu0 0
        %1005 = vmatpush1.bf16.xpose.msra.mxu0 %v988
        %1006 = vmatprep.subr.bf16.mxu0 0
        %1007 = vmatpush2.bf16.xpose.msra.mxu0 0
        %1008 = vmatprep.subr.bf16.mxu0 0
        %1009 = vmatpush2.bf16.xpose.msra.mxu0 0
        %1010 = vmatprep.subr.bf16.mxu0 0
        %1011 = vmatpush2.bf16.xpose.msra.mxu0 0
        %1012 = vmatprep.subr.bf16.mxu0 0
        %1013 = vmatpush2.bf16.xpose.msra.mxu0 0
        %1014 = vmatprep.subr.bf16.mxu0 0
        %1015 = vmatpush2.bf16.xpose.msra.mxu0 0
        %1016 = vmatprep.subr.bf16.mxu0 0
        %1017 = vmatpush2.bf16.xpose.msra.mxu0 0
        %1018 = vmatprep.subr.bf16.mxu0 0
        %1019 = vmatpush2.bf16.xpose.msra.mxu0 0
        %1020 = vmatprep.subr.bf16.mxu0 0
        %1021 = vmatpush2.bf16.xpose.msra.mxu0 0
        %1022 = vmatprep.mubr.bf16.mxu0 0
        %1023 = vmatmul.mubr.bf16.gmra.mxu0 %v985
        %v1024 = vpop.f32.mrf.mxu0
        %v1025 = vadd.f32 0.0, %v1024
        %v1026 = vpop.f32.mrf.mxu0
        %v1027 = vpop.f32.mrf.mxu0
        %v1028 = vpop.f32.mrf.mxu0
        %1029 = vdwg.mxu0
        %v1030 = vsel %vm693, %v1025, -1e+10
        %v1031 = vsel %vm646, %v1030, -inf
        %1032 = vmax.xlane.f32.xlu0 %v1031
        %v1033 = vpop.xlane.xlu0 %1032
        %v1034 = vsub.f32 %v1030, %v1033
        %v1035 = vmul.f32 %v1034, 1.442695
        %v1036 = vpow.pop %v1035
        %v1037 = vsel %vm646, %v1036, 0.0
        %1038 = vadd.xlane.f32.xlu0 %v1037
        %v1039 = vpop.xlane.xlu0 %1038
        %v1040 = vrcp.pop %v1039
        %v1041 = vmul.f32 %v1036, %v1040
        %v1042 = vpack.c.bf16 %v1041, %v1041
        %1043 = vrot.lane.b32.xlu0 %v642, 40
        %v1044 = vpop.permute.xlu0 %1043
        %v1046 = vsel %vm646, %v1042, 0
        %v1049 = vsel %vm713, %v1044, 0
        %1051 = vmatprep.subr.bf16.mxu0 0
        %1052 = vmatpush1.bf16.msra.mxu0 0
        %1053 = vmatprep.subr.bf16.mxu0 0
        %1054 = vmatpush1.bf16.msra.mxu0 0
        %1055 = vmatprep.subr.bf16.mxu0 0
        %1056 = vmatpush1.bf16.msra.mxu0 0
        %1057 = vmatprep.subr.bf16.mxu0 0
        %1058 = vmatpush1.bf16.msra.mxu0 0
        %1059 = vmatprep.subr.bf16.mxu0 0
        %1060 = vmatpush1.bf16.msra.mxu0 0
        %1061 = vmatprep.subr.bf16.mxu0 0
        %1062 = vmatpush1.bf16.msra.mxu0 0
        %1063 = vmatprep.subr.bf16.mxu0 0
        %1064 = vmatpush1.bf16.msra.mxu0 0
        %1065 = vmatprep.subr.bf16.mxu0 0
        %1066 = vmatpush1.bf16.msra.mxu0 %v1049
        %1067 = vmatprep.subr.bf16.mxu0 0
        %1068 = vmatpush2.bf16.msra.mxu0 0
        %1069 = vmatprep.subr.bf16.mxu0 0
        %1070 = vmatpush2.bf16.msra.mxu0 0
        %1071 = vmatprep.subr.bf16.mxu0 0
        %1072 = vmatpush2.bf16.msra.mxu0 0
        %1073 = vmatprep.subr.bf16.mxu0 0
        %1074 = vmatpush2.bf16.msra.mxu0 0
        %1075 = vmatprep.subr.bf16.mxu0 0
        %1076 = vmatpush2.bf16.msra.mxu0 0
        %1077 = vmatprep.subr.bf16.mxu0 0
        %1078 = vmatpush2.bf16.msra.mxu0 0
        %1079 = vmatprep.subr.bf16.mxu0 0
        %1080 = vmatpush2.bf16.msra.mxu0 0
        %1081 = vmatprep.subr.bf16.mxu0 0
        %1082 = vmatpush2.bf16.msra.mxu0 0
        %1083 = vmatprep.mubr.bf16.mxu0 0
        %1084 = vmatmul.mubr.bf16.gmra.mxu0 %v1046
        %v1085 = vpop.f32.mrf.mxu0
        %v1086 = vadd.f32 0.0, %v1085
        %v1087 = vpop.f32.mrf.mxu0
        %v1088 = vpop.f32.mrf.mxu0
        %v1089 = vpop.f32.mrf.mxu0
        %1090 = vdwg.mxu0
        %1092 = vrot.lane.b32.xlu0 %v864, 8
        %v1093 = vpop.permute.xlu0 %1092
        %1096 = vrot.lane.b32.xlu0 %v975, 16
        %v1097 = vpop.permute.xlu0 %1096
        %1100 = vrot.lane.b32.xlu0 %v1086, 24
        %v1101 = vpop.permute.xlu0 %1100
        %v1103 = vsel %vm646, %v752, %v1093
        %vm1104 = vcmask 130048
        %v1105 = vsel %vm1104, %v1103, %v1097
        %vm1106 = vcmask 195584
        %v1107 = vsel %vm1106, %v1105, %v1101
        %s1108 = scalar_lea.vmem [#allocation2], 8
        %v1109 = vld [vmem:[%s1108] sm:$0xff]
        %v1110 = vpack.c.bf16 %v618, %v618
        %v1111 = vpack.c.bf16 %v628, %v628
        %v1112 = vpack.c.bf16 %v638, %v638
        %1114 = vrot.lane.b32.xlu0 %v1111, 96
        %v1115 = vpop.permute.xlu0 %1114
        %v1117 = vsel %vm646, %v1110, 0
        %v1120 = vsel %vm646, %v1115, 0
        %1122 = vmatprep.subr.bf16.mxu0 0
        %1123 = vmatpush1.bf16.xpose.msra.mxu0 0
        %1124 = vmatprep.subr.bf16.mxu0 0
        %1125 = vmatpush1.bf16.xpose.msra.mxu0 0
        %1126 = vmatprep.subr.bf16.mxu0 0
        %1127 = vmatpush1.bf16.xpose.msra.mxu0 0
        %1128 = vmatprep.subr.bf16.mxu0 0
        %1129 = vmatpush1.bf16.xpose.msra.mxu0 0
        %1130 = vmatprep.subr.bf16.mxu0 0
        %1131 = vmatpush1.bf16.xpose.msra.mxu0 0
        %1132 = vmatprep.subr.bf16.mxu0 0
        %1133 = vmatpush1.bf16.xpose.msra.mxu0 0
        %1134 = vmatprep.subr.bf16.mxu0 0
        %1135 = vmatpush1.bf16.xpose.msra.mxu0 0
        %1136 = vmatprep.subr.bf16.mxu0 0
        %1137 = vmatpush1.bf16.xpose.msra.mxu0 %v1120
        %1138 = vmatprep.subr.bf16.mxu0 0
        %1139 = vmatpush2.bf16.xpose.msra.mxu0 0
        %1140 = vmatprep.subr.bf16.mxu0 0
        %1141 = vmatpush2.bf16.xpose.msra.mxu0 0
        %1142 = vmatprep.subr.bf16.mxu0 0
        %1143 = vmatpush2.bf16.xpose.msra.mxu0 0
        %1144 = vmatprep.subr.bf16.mxu0 0
        %1145 = vmatpush2.bf16.xpose.msra.mxu0 0
        %1146 = vmatprep.subr.bf16.mxu0 0
        %1147 = vmatpush2.bf16.xpose.msra.mxu0 0
        %1148 = vmatprep.subr.bf16.mxu0 0
        %1149 = vmatpush2.bf16.xpose.msra.mxu0 0
        %1150 = vmatprep.subr.bf16.mxu0 0
        %1151 = vmatpush2.bf16.xpose.msra.mxu0 0
        %1152 = vmatprep.subr.bf16.mxu0 0
        %1153 = vmatpush2.bf16.xpose.msra.mxu0 0
        %1154 = vmatprep.mubr.bf16.mxu0 0
        %1155 = vmatmul.mubr.bf16.gmra.mxu0 %v1117
        %v1156 = vpop.f32.mrf.mxu0
        %v1157 = vadd.f32 0.0, %v1156
        %v1158 = vpop.f32.mrf.mxu0
        %v1159 = vpop.f32.mrf.mxu0
        %v1160 = vpop.f32.mrf.mxu0
        %1161 = vdwg.mxu0
        %vm1162 = vcmp.gt.f32.partialorder %v1109, 0.0
        %v1163 = vsel %vm1162, %v1157, -1e+10
        %v1164 = vsel %vm646, %v1163, -inf
        %1165 = vmax.xlane.f32.xlu0 %v1164
        %v1166 = vpop.xlane.xlu0 %1165
        %v1167 = vsub.f32 %v1163, %v1166
        %v1168 = vmul.f32 %v1167, 1.442695
        %v1169 = vpow.pop %v1168
        %v1170 = vsel %vm646, %v1169, 0.0
        %1171 = vadd.xlane.f32.xlu0 %v1170
        %v1172 = vpop.xlane.xlu0 %1171
        %v1173 = vrcp.pop %v1172
        %v1174 = vmul.f32 %v1169, %v1173
        %v1175 = vpack.c.bf16 %v1174, %v1174
        %1177 = vrot.lane.b32.xlu0 %v1112, 64
        %v1178 = vpop.permute.xlu0 %1177
        %v1180 = vsel %vm646, %v1175, 0
        %v1183 = vsel %vm713, %v1178, 0
        %1185 = vmatprep.subr.bf16.mxu0 0
        %1186 = vmatpush1.bf16.msra.mxu0 0
        %1187 = vmatprep.subr.bf16.mxu0 0
        %1188 = vmatpush1.bf16.msra.mxu0 0
        %1189 = vmatprep.subr.bf16.mxu0 0
        %1190 = vmatpush1.bf16.msra.mxu0 0
        %1191 = vmatprep.subr.bf16.mxu0 0
        %1192 = vmatpush1.bf16.msra.mxu0 0
        %1193 = vmatprep.subr.bf16.mxu0 0
        %1194 = vmatpush1.bf16.msra.mxu0 0
        %1195 = vmatprep.subr.bf16.mxu0 0
        %1196 = vmatpush1.bf16.msra.mxu0 0
        %1197 = vmatprep.subr.bf16.mxu0 0
        %1198 = vmatpush1.bf16.msra.mxu0 0
        %1199 = vmatprep.subr.bf16.mxu0 0
        %1200 = vmatpush1.bf16.msra.mxu0 %v1183
        %1201 = vmatprep.subr.bf16.mxu0 0
        %1202 = vmatpush2.bf16.msra.mxu0 0
        %1203 = vmatprep.subr.bf16.mxu0 0
        %1204 = vmatpush2.bf16.msra.mxu0 0
        %1205 = vmatprep.subr.bf16.mxu0 0
        %1206 = vmatpush2.bf16.msra.mxu0 0
        %1207 = vmatprep.subr.bf16.mxu0 0
        %1208 = vmatpush2.bf16.msra.mxu0 0
        %1209 = vmatprep.subr.bf16.mxu0 0
        %1210 = vmatpush2.bf16.msra.mxu0 0
        %1211 = vmatprep.subr.bf16.mxu0 0
        %1212 = vmatpush2.bf16.msra.mxu0 0
        %1213 = vmatprep.subr.bf16.mxu0 0
        %1214 = vmatpush2.bf16.msra.mxu0 0
        %1215 = vmatprep.subr.bf16.mxu0 0
        %1216 = vmatpush2.bf16.msra.mxu0 0
        %1217 = vmatprep.mubr.bf16.mxu0 0
        %1218 = vmatmul.mubr.bf16.gmra.mxu0 %v1180
        %v1219 = vpop.f32.mrf.mxu0
        %v1220 = vadd.f32 0.0, %v1219
        %v1221 = vpop.f32.mrf.mxu0
        %v1222 = vpop.f32.mrf.mxu0
        %v1223 = vpop.f32.mrf.mxu0
        %1224 = vdwg.mxu0
        %1226 = vrot.lane.b32.xlu0 %v1110, 120
        %v1227 = vpop.permute.xlu0 %1226
        %1228 = vrot.lane.b32.xlu0 %v1111, 88
        %v1229 = vpop.permute.xlu0 %1228
        %v1231 = vsel %vm646, %v1227, 0
        %v1234 = vsel %vm646, %v1229, 0
        %1236 = vmatprep.subr.bf16.mxu0 0
        %1237 = vmatpush1.bf16.xpose.msra.mxu0 0
        %1238 = vmatprep.subr.bf16.mxu0 0
        %1239 = vmatpush1.bf16.xpose.msra.mxu0 0
        %1240 = vmatprep.subr.bf16.mxu0 0
        %1241 = vmatpush1.bf16.xpose.msra.mxu0 0
        %1242 = vmatprep.subr.bf16.mxu0 0
        %1243 = vmatpush1.bf16.xpose.msra.mxu0 0
        %1244 = vmatprep.subr.bf16.mxu0 0
        %1245 = vmatpush1.bf16.xpose.msra.mxu0 0
        %1246 = vmatprep.subr.bf16.mxu0 0
        %1247 = vmatpush1.bf16.xpose.msra.mxu0 0
        %1248 = vmatprep.subr.bf16.mxu0 0
        %1249 = vmatpush1.bf16.xpose.msra.mxu0 0
        %1250 = vmatprep.subr.bf16.mxu0 0
        %1251 = vmatpush1.bf16.xpose.msra.mxu0 %v1234
        %1252 = vmatprep.subr.bf16.mxu0 0
        %1253 = vmatpush2.bf16.xpose.msra.mxu0 0
        %1254 = vmatprep.subr.bf16.mxu0 0
        %1255 = vmatpush2.bf16.xpose.msra.mxu0 0
        %1256 = vmatprep.subr.bf16.mxu0 0
        %1257 = vmatpush2.bf16.xpose.msra.mxu0 0
        %1258 = vmatprep.subr.bf16.mxu0 0
        %1259 = vmatpush2.bf16.xpose.msra.mxu0 0
        %1260 = vmatprep.subr.bf16.mxu0 0
        %1261 = vmatpush2.bf16.xpose.msra.mxu0 0
        %1262 = vmatprep.subr.bf16.mxu0 0
        %1263 = vmatpush2.bf16.xpose.msra.mxu0 0
        %1264 = vmatprep.subr.bf16.mxu0 0
        %1265 = vmatpush2.bf16.xpose.msra.mxu0 0
        %1266 = vmatprep.subr.bf16.mxu0 0
        %1267 = vmatpush2.bf16.xpose.msra.mxu0 0
        %1268 = vmatprep.mubr.bf16.mxu0 0
        %1269 = vmatmul.mubr.bf16.gmra.mxu0 %v1231
        %v1270 = vpop.f32.mrf.mxu0
        %v1271 = vadd.f32 0.0, %v1270
        %v1272 = vpop.f32.mrf.mxu0
        %v1273 = vpop.f32.mrf.mxu0
        %v1274 = vpop.f32.mrf.mxu0
        %1275 = vdwg.mxu0
        %v1276 = vsel %vm1162, %v1271, -1e+10
        %v1277 = vsel %vm646, %v1276, -inf
        %1278 = vmax.xlane.f32.xlu0 %v1277
        %v1279 = vpop.xlane.xlu0 %1278
        %v1280 = vsub.f32 %v1276, %v1279
        %v1281 = vmul.f32 %v1280, 1.442695
        %v1282 = vpow.pop %v1281
        %v1283 = vsel %vm646, %v1282, 0.0
        %1284 = vadd.xlane.f32.xlu0 %v1283
        %v1285 = vpop.xlane.xlu0 %1284
        %v1286 = vrcp.pop %v1285
        %v1287 = vmul.f32 %v1282, %v1286
        %v1288 = vpack.c.bf16 %v1287, %v1287
        %1289 = vrot.lane.b32.xlu0 %v1112, 56
        %v1290 = vpop.permute.xlu0 %1289
        %v1292 = vsel %vm646, %v1288, 0
        %v1295 = vsel %vm713, %v1290, 0
        %1297 = vmatprep.subr.bf16.mxu0 0
        %1298 = vmatpush1.bf16.msra.mxu0 0
        %1299 = vmatprep.subr.bf16.mxu0 0
        %1300 = vmatpush1.bf16.msra.mxu0 0
        %1301 = vmatprep.subr.bf16.mxu0 0
        %1302 = vmatpush1.bf16.msra.mxu0 0
        %1303 = vmatprep.subr.bf16.mxu0 0
        %1304 = vmatpush1.bf16.msra.mxu0 0
        %1305 = vmatprep.subr.bf16.mxu0 0
        %1306 = vmatpush1.bf16.msra.mxu0 0
        %1307 = vmatprep.subr.bf16.mxu0 0
        %1308 = vmatpush1.bf16.msra.mxu0 0
        %1309 = vmatprep.subr.bf16.mxu0 0
        %1310 = vmatpush1.bf16.msra.mxu0 0
        %1311 = vmatprep.subr.bf16.mxu0 0
        %1312 = vmatpush1.bf16.msra.mxu0 %v1295
        %1313 = vmatprep.subr.bf16.mxu0 0
        %1314 = vmatpush2.bf16.msra.mxu0 0
        %1315 = vmatprep.subr.bf16.mxu0 0
        %1316 = vmatpush2.bf16.msra.mxu0 0
        %1317 = vmatprep.subr.bf16.mxu0 0
        %1318 = vmatpush2.bf16.msra.mxu0 0
        %1319 = vmatprep.subr.bf16.mxu0 0
        %1320 = vmatpush2.bf16.msra.mxu0 0
        %1321 = vmatprep.subr.bf16.mxu0 0
        %1322 = vmatpush2.bf16.msra.mxu0 0
        %1323 = vmatprep.subr.bf16.mxu0 0
        %1324 = vmatpush2.bf16.msra.mxu0 0
        %1325 = vmatprep.subr.bf16.mxu0 0
        %1326 = vmatpush2.bf16.msra.mxu0 0
        %1327 = vmatprep.subr.bf16.mxu0 0
        %1328 = vmatpush2.bf16.msra.mxu0 0
        %1329 = vmatprep.mubr.bf16.mxu0 0
        %1330 = vmatmul.mubr.bf16.gmra.mxu0 %v1292
        %v1331 = vpop.f32.mrf.mxu0
        %v1332 = vadd.f32 0.0, %v1331
        %v1333 = vpop.f32.mrf.mxu0
        %v1334 = vpop.f32.mrf.mxu0
        %v1335 = vpop.f32.mrf.mxu0
        %1336 = vdwg.mxu0
        %1337 = vrot.lane.b32.xlu0 %v1110, 112
        %v1338 = vpop.permute.xlu0 %1337
        %1339 = vrot.lane.b32.xlu0 %v1111, 80
        %v1340 = vpop.permute.xlu0 %1339
        %v1342 = vsel %vm646, %v1338, 0
        %v1345 = vsel %vm646, %v1340, 0
        %1347 = vmatprep.subr.bf16.mxu0 0
        %1348 = vmatpush1.bf16.xpose.msra.mxu0 0
        %1349 = vmatprep.subr.bf16.mxu0 0
        %1350 = vmatpush1.bf16.xpose.msra.mxu0 0
        %1351 = vmatprep.subr.bf16.mxu0 0
        %1352 = vmatpush1.bf16.xpose.msra.mxu0 0
        %1353 = vmatprep.subr.bf16.mxu0 0
        %1354 = vmatpush1.bf16.xpose.msra.mxu0 0
        %1355 = vmatprep.subr.bf16.mxu0 0
        %1356 = vmatpush1.bf16.xpose.msra.mxu0 0
        %1357 = vmatprep.subr.bf16.mxu0 0
        %1358 = vmatpush1.bf16.xpose.msra.mxu0 0
        %1359 = vmatprep.subr.bf16.mxu0 0
        %1360 = vmatpush1.bf16.xpose.msra.mxu0 0
        %1361 = vmatprep.subr.bf16.mxu0 0
        %1362 = vmatpush1.bf16.xpose.msra.mxu0 %v1345
        %1363 = vmatprep.subr.bf16.mxu0 0
        %1364 = vmatpush2.bf16.xpose.msra.mxu0 0
        %1365 = vmatprep.subr.bf16.mxu0 0
        %1366 = vmatpush2.bf16.xpose.msra.mxu0 0
        %1367 = vmatprep.subr.bf16.mxu0 0
        %1368 = vmatpush2.bf16.xpose.msra.mxu0 0
        %1369 = vmatprep.subr.bf16.mxu0 0
        %1370 = vmatpush2.bf16.xpose.msra.mxu0 0
        %1371 = vmatprep.subr.bf16.mxu0 0
        %1372 = vmatpush2.bf16.xpose.msra.mxu0 0
        %1373 = vmatprep.subr.bf16.mxu0 0
        %1374 = vmatpush2.bf16.xpose.msra.mxu0 0
        %1375 = vmatprep.subr.bf16.mxu0 0
        %1376 = vmatpush2.bf16.xpose.msra.mxu0 0
        %1377 = vmatprep.subr.bf16.mxu0 0
        %1378 = vmatpush2.bf16.xpose.msra.mxu0 0
        %1379 = vmatprep.mubr.bf16.mxu0 0
        %1380 = vmatmul.mubr.bf16.gmra.mxu0 %v1342
        %v1381 = vpop.f32.mrf.mxu0
        %v1382 = vadd.f32 0.0, %v1381
        %v1383 = vpop.f32.mrf.mxu0
        %v1384 = vpop.f32.mrf.mxu0
        %v1385 = vpop.f32.mrf.mxu0
        %1386 = vdwg.mxu0
        %v1387 = vsel %vm1162, %v1382, -1e+10
        %v1388 = vsel %vm646, %v1387, -inf
        %1389 = vmax.xlane.f32.xlu0 %v1388
        %v1390 = vpop.xlane.xlu0 %1389
        %v1391 = vsub.f32 %v1387, %v1390
        %v1392 = vmul.f32 %v1391, 1.442695
        %v1393 = vpow.pop %v1392
        %v1394 = vsel %vm646, %v1393, 0.0
        %1395 = vadd.xlane.f32.xlu0 %v1394
        %v1396 = vpop.xlane.xlu0 %1395
        %v1397 = vrcp.pop %v1396
        %v1398 = vmul.f32 %v1393, %v1397
        %v1399 = vpack.c.bf16 %v1398, %v1398
        %1400 = vrot.lane.b32.xlu0 %v1112, 48
        %v1401 = vpop.permute.xlu0 %1400
        %v1403 = vsel %vm646, %v1399, 0
        %v1406 = vsel %vm713, %v1401, 0
        %1408 = vmatprep.subr.bf16.mxu0 0
        %1409 = vmatpush1.bf16.msra.mxu0 0
        %1410 = vmatprep.subr.bf16.mxu0 0
        %1411 = vmatpush1.bf16.msra.mxu0 0
        %1412 = vmatprep.subr.bf16.mxu0 0
        %1413 = vmatpush1.bf16.msra.mxu0 0
        %1414 = vmatprep.subr.bf16.mxu0 0
        %1415 = vmatpush1.bf16.msra.mxu0 0
        %1416 = vmatprep.subr.bf16.mxu0 0
        %1417 = vmatpush1.bf16.msra.mxu0 0
        %1418 = vmatprep.subr.bf16.mxu0 0
        %1419 = vmatpush1.bf16.msra.mxu0 0
        %1420 = vmatprep.subr.bf16.mxu0 0
        %1421 = vmatpush1.bf16.msra.mxu0 0
        %1422 = vmatprep.subr.bf16.mxu0 0
        %1423 = vmatpush1.bf16.msra.mxu0 %v1406
        %1424 = vmatprep.subr.bf16.mxu0 0
        %1425 = vmatpush2.bf16.msra.mxu0 0
        %1426 = vmatprep.subr.bf16.mxu0 0
        %1427 = vmatpush2.bf16.msra.mxu0 0
        %1428 = vmatprep.subr.bf16.mxu0 0
        %1429 = vmatpush2.bf16.msra.mxu0 0
        %1430 = vmatprep.subr.bf16.mxu0 0
        %1431 = vmatpush2.bf16.msra.mxu0 0
        %1432 = vmatprep.subr.bf16.mxu0 0
        %1433 = vmatpush2.bf16.msra.mxu0 0
        %1434 = vmatprep.subr.bf16.mxu0 0
        %1435 = vmatpush2.bf16.msra.mxu0 0
        %1436 = vmatprep.subr.bf16.mxu0 0
        %1437 = vmatpush2.bf16.msra.mxu0 0
        %1438 = vmatprep.subr.bf16.mxu0 0
        %1439 = vmatpush2.bf16.msra.mxu0 0
        %1440 = vmatprep.mubr.bf16.mxu0 0
        %1441 = vmatmul.mubr.bf16.gmra.mxu0 %v1403
        %v1442 = vpop.f32.mrf.mxu0
        %v1443 = vadd.f32 0.0, %v1442
        %v1444 = vpop.f32.mrf.mxu0
        %v1445 = vpop.f32.mrf.mxu0
        %v1446 = vpop.f32.mrf.mxu0
        %1447 = vdwg.mxu0
        %1448 = vrot.lane.b32.xlu0 %v1110, 104
        %v1449 = vpop.permute.xlu0 %1448
        %1450 = vrot.lane.b32.xlu0 %v1111, 72
        %v1451 = vpop.permute.xlu0 %1450
        %v1453 = vsel %vm646, %v1449, 0
        %v1456 = vsel %vm646, %v1451, 0
        %1458 = vmatprep.subr.bf16.mxu0 0
        %1459 = vmatpush1.bf16.xpose.msra.mxu0 0
        %1460 = vmatprep.subr.bf16.mxu0 0
        %1461 = vmatpush1.bf16.xpose.msra.mxu0 0
        %1462 = vmatprep.subr.bf16.mxu0 0
        %1463 = vmatpush1.bf16.xpose.msra.mxu0 0
        %1464 = vmatprep.subr.bf16.mxu0 0
        %1465 = vmatpush1.bf16.xpose.msra.mxu0 0
        %1466 = vmatprep.subr.bf16.mxu0 0
        %1467 = vmatpush1.bf16.xpose.msra.mxu0 0
        %1468 = vmatprep.subr.bf16.mxu0 0
        %1469 = vmatpush1.bf16.xpose.msra.mxu0 0
        %1470 = vmatprep.subr.bf16.mxu0 0
        %1471 = vmatpush1.bf16.xpose.msra.mxu0 0
        %1472 = vmatprep.subr.bf16.mxu0 0
        %1473 = vmatpush1.bf16.xpose.msra.mxu0 %v1456
        %1474 = vmatprep.subr.bf16.mxu0 0
        %1475 = vmatpush2.bf16.xpose.msra.mxu0 0
        %1476 = vmatprep.subr.bf16.mxu0 0
        %1477 = vmatpush2.bf16.xpose.msra.mxu0 0
        %1478 = vmatprep.subr.bf16.mxu0 0
        %1479 = vmatpush2.bf16.xpose.msra.mxu0 0
        %1480 = vmatprep.subr.bf16.mxu0 0
        %1481 = vmatpush2.bf16.xpose.msra.mxu0 0
        %1482 = vmatprep.subr.bf16.mxu0 0
        %1483 = vmatpush2.bf16.xpose.msra.mxu0 0
        %1484 = vmatprep.subr.bf16.mxu0 0
        %1485 = vmatpush2.bf16.xpose.msra.mxu0 0
        %1486 = vmatprep.subr.bf16.mxu0 0
        %1487 = vmatpush2.bf16.xpose.msra.mxu0 0
        %1488 = vmatprep.subr.bf16.mxu0 0
        %1489 = vmatpush2.bf16.xpose.msra.mxu0 0
        %1490 = vmatprep.mubr.bf16.mxu0 0
        %1491 = vmatmul.mubr.bf16.gmra.mxu0 %v1453
        %v1492 = vpop.f32.mrf.mxu0
        %v1493 = vadd.f32 0.0, %v1492
        %v1494 = vpop.f32.mrf.mxu0
        %v1495 = vpop.f32.mrf.mxu0
        %v1496 = vpop.f32.mrf.mxu0
        %1497 = vdwg.mxu0
        %v1498 = vsel %vm1162, %v1493, -1e+10
        %v1499 = vsel %vm646, %v1498, -inf
        %1500 = vmax.xlane.f32.xlu0 %v1499
        %v1501 = vpop.xlane.xlu0 %1500
        %v1502 = vsub.f32 %v1498, %v1501
        %v1503 = vmul.f32 %v1502, 1.442695
        %v1504 = vpow.pop %v1503
        %v1505 = vsel %vm646, %v1504, 0.0
        %1506 = vadd.xlane.f32.xlu0 %v1505
        %v1507 = vpop.xlane.xlu0 %1506
        %v1508 = vrcp.pop %v1507
        %v1509 = vmul.f32 %v1504, %v1508
        %v1510 = vpack.c.bf16 %v1509, %v1509
        %1511 = vrot.lane.b32.xlu0 %v1112, 40
        %v1512 = vpop.permute.xlu0 %1511
        %v1514 = vsel %vm646, %v1510, 0
        %v1517 = vsel %vm713, %v1512, 0
        %1519 = vmatprep.subr.bf16.mxu0 0
        %1520 = vmatpush1.bf16.msra.mxu0 0
        %1521 = vmatprep.subr.bf16.mxu0 0
        %1522 = vmatpush1.bf16.msra.mxu0 0
        %1523 = vmatprep.subr.bf16.mxu0 0
        %1524 = vmatpush1.bf16.msra.mxu0 0
        %1525 = vmatprep.subr.bf16.mxu0 0
        %1526 = vmatpush1.bf16.msra.mxu0 0
        %1527 = vmatprep.subr.bf16.mxu0 0
        %1528 = vmatpush1.bf16.msra.mxu0 0
        %1529 = vmatprep.subr.bf16.mxu0 0
        %1530 = vmatpush1.bf16.msra.mxu0 0
        %1531 = vmatprep.subr.bf16.mxu0 0
        %1532 = vmatpush1.bf16.msra.mxu0 0
        %1533 = vmatprep.subr.bf16.mxu0 0
        %1534 = vmatpush1.bf16.msra.mxu0 %v1517
        %1535 = vmatprep.subr.bf16.mxu0 0
        %1536 = vmatpush2.bf16.msra.mxu0 0
        %1537 = vmatprep.subr.bf16.mxu0 0
        %1538 = vmatpush2.bf16.msra.mxu0 0
        %1539 = vmatprep.subr.bf16.mxu0 0
        %1540 = vmatpush2.bf16.msra.mxu0 0
        %1541 = vmatprep.subr.bf16.mxu0 0
        %1542 = vmatpush2.bf16.msra.mxu0 0
        %1543 = vmatprep.subr.bf16.mxu0 0
        %1544 = vmatpush2.bf16.msra.mxu0 0
        %1545 = vmatprep.subr.bf16.mxu0 0
        %1546 = vmatpush2.bf16.msra.mxu0 0
        %1547 = vmatprep.subr.bf16.mxu0 0
        %1548 = vmatpush2.bf16.msra.mxu0 0
        %1549 = vmatprep.subr.bf16.mxu0 0
        %1550 = vmatpush2.bf16.msra.mxu0 0
        %1551 = vmatprep.mubr.bf16.mxu0 0
        %1552 = vmatmul.mubr.bf16.gmra.mxu0 %v1514
        %v1553 = vpop.f32.mrf.mxu0
        %v1554 = vadd.f32 0.0, %v1553
        %v1555 = vpop.f32.mrf.mxu0
        %v1556 = vpop.f32.mrf.mxu0
        %v1557 = vpop.f32.mrf.mxu0
        %1558 = vdwg.mxu0
        %1560 = vrot.lane.b32.xlu0 %v1332, 8
        %v1561 = vpop.permute.xlu0 %1560
        %1564 = vrot.lane.b32.xlu0 %v1443, 16
        %v1565 = vpop.permute.xlu0 %1564
        %1568 = vrot.lane.b32.xlu0 %v1554, 24
        %v1569 = vpop.permute.xlu0 %1568
        %v1571 = vsel %vm646, %v1220, %v1561
        %v1572 = vsel %vm1104, %v1571, %v1565
        %v1573 = vsel %vm1106, %v1572, %v1569
        %v1574 = vpack.c.bf16 %v1573, %v1107
        %v1575 = vld [vmem:[%s423] sm:$0xf]
        %v1576 = vld [vmem:[%s423 + $0x4] sm:$0xf]
        %v1577 = vld [vmem:[%s423 + $0x8] sm:$0xf]
        %v1578 = vld [vmem:[%s423 + $0xc] sm:$0xf]
        %v1579 = vlaneseq
        %v1580 = vshrl.u32 %v1579, 7
        %v1581 = vsub.s32 3, %v1580
        %v1582 = vrot.slane %v546, %v1581
        %v1587 = vunpack.c.l.b16 %v1575
        %v1588 = vunpack.c.l.b16 %v1576
        %v1589 = vunpack.c.l.b16 %v1577
        %v1590 = vunpack.c.l.b16 %v1578
        %v1591 = vpack.c.b16 %v1588, %v1587
        %v1592 = vpack.c.b16 %v1590, %v1589
        %v1596 = vsel %vm568, %v1574, 0
        %1598 = vmatprep.subr.bf16.mxu0 0
        %1599 = vmatpush1.bf16.msra.mxu0 0
        %1600 = vmatprep.subr.bf16.mxu0 0
        %1601 = vmatpush1.bf16.msra.mxu0 0
        %1602 = vmatprep.subr.bf16.mxu0 0
        %1603 = vmatpush1.bf16.msra.mxu0 0
        %1604 = vmatprep.subr.bf16.mxu0 0
        %1605 = vmatpush1.bf16.msra.mxu0 0
        %1606 = vmatprep.subr.bf16.mxu0 0
        %1607 = vmatpush1.bf16.msra.mxu0 0
        %1608 = vmatprep.subr.bf16.mxu0 0
        %1609 = vmatpush1.bf16.msra.mxu0 0
        %1610 = vmatprep.subr.bf16.mxu0 0
        %1611 = vmatpush1.bf16.msra.mxu0 %v1592
        %1612 = vmatprep.subr.bf16.mxu0 0
        %1613 = vmatpush1.bf16.msra.mxu0 %v1591
        %1614 = vmatprep.subr.bf16.mxu0 0
        %1615 = vmatpush2.bf16.msra.mxu0 0
        %1616 = vmatprep.subr.bf16.mxu0 0
        %1617 = vmatpush2.bf16.msra.mxu0 0
        %1618 = vmatprep.subr.bf16.mxu0 0
        %1619 = vmatpush2.bf16.msra.mxu0 0
        %1620 = vmatprep.subr.bf16.mxu0 0
        %1621 = vmatpush2.bf16.msra.mxu0 0
        %1622 = vmatprep.subr.bf16.mxu0 0
        %1623 = vmatpush2.bf16.msra.mxu0 0
        %1624 = vmatprep.subr.bf16.mxu0 0
        %1625 = vmatpush2.bf16.msra.mxu0 0
        %1626 = vmatprep.subr.bf16.mxu0 0
        %1627 = vmatpush2.bf16.msra.mxu0 0
        %1628 = vmatprep.subr.bf16.mxu0 0
        %1629 = vmatpush2.bf16.msra.mxu0 0
        %1630 = vmatprep.mubr.bf16.mxu0 0
        %1631 = vmatmul.mubr.bf16.gmra.mxu0 %v1596
        %v1632 = vpop.f32.mrf.mxu0
        %v1633 = vadd.f32 %v1582, %v1632
        %v1634 = vpop.f32.mrf.mxu0
        %v1635 = vpop.f32.mrf.mxu0
        %v1636 = vadd.f32 %v1582, %v1635
        %v1637 = vpop.f32.mrf.mxu0
        %1638 = vdwg.mxu0
        %v1639 = vadd.f32 %v549, %v1633
        %v1640 = vadd.f32 %v550, %v1636
        %v1641 = vsel %vm568, %v1639, 0.0
        %1642 = vadd.xlane.f32.xlu0 %v1641
        %v1643 = vpop.xlane.xlu0 %1642
        %v1644 = vsel %vm568, %v1640, 0.0
        %1645 = vadd.xlane.f32.xlu0 %v1644
        %v1646 = vpop.xlane.xlu0 %1645
        %v1647 = vrcp.pop 32.0
        %v1648 = vmul.f32 %v1643, %v1647
        %v1649 = vmul.f32 %v1646, %v1647
        %v1650 = vsub.f32 %v1639, %v1648
        %v1651 = vsub.f32 %v1640, %v1649
        %v1652 = vmul.f32 %v1650, %v1650
        %v1653 = vmul.f32 %v1651, %v1651
        %v1654 = vsel %vm568, %v1652, 0.0
        %1655 = vadd.xlane.f32.xlu0 %v1654
        %v1656 = vpop.xlane.xlu0 %1655
        %v1657 = vsel %vm568, %v1653, 0.0
        %1658 = vadd.xlane.f32.xlu0 %v1657
        %v1659 = vpop.xlane.xlu0 %1658
        %v1660 = vmul.f32 %v1656, %v1647
        %v1661 = vmul.f32 %v1659, %v1647
        %v1662 = vadd.f32 %v1660, 0.02
        %v1663 = vadd.f32 %v1661, 0.02
        %v1664 = vrsqrt.pop %v1662
        %v1665 = vrsqrt.pop %v1663
        %v1666 = vmul.f32 %v1650, %v1664
        %v1667 = vmul.f32 %v1651, %v1665
        %v1668 = vlaneseq
        %v1669 = vshrl.u32 %v1668, 7
        %v1670 = vsub.s32 4, %v1669
        %v1671 = vrot.slane %v546, %v1670
        %v1672 = vmul.f32 %v1666, %v1671
        %v1673 = vmul.f32 %v1667, %v1671
        %v1674 = vlaneseq
        %v1675 = vshrl.u32 %v1674, 7
        %v1676 = vsub.s32 5, %v1675
        %v1677 = vrot.slane %v546, %v1676
        %v1678 = vadd.f32 %v1672, %v1677
        %v1679 = vadd.f32 %v1673, %v1677
        %v1680 = vpack.c.bf16 %v1679, %v1678
        %v1681 = vld [vmem:[%s428] sm:$0xf]
        %v1682 = vld [vmem:[%s428 + $0x4] sm:$0xf]
        %v1683 = vld [vmem:[%s428 + $0x8] sm:$0xf]
        %v1684 = vld [vmem:[%s428 + $0xc] sm:$0xf]
        %v1686 = vlaneseq
        %v1687 = vshrl.u32 %v1686, 7
        %v1688 = vsub.s32 0, %v1687
        %v1689 = vrot.slane %v548, %v1688
        %v1695 = vunpack.c.l.b16 %v1681
        %v1696 = vunpack.c.l.b16 %v1682
        %v1697 = vunpack.c.l.b16 %v1683
        %v1698 = vunpack.c.l.b16 %v1684
        %v1699 = vpack.c.b16 %v1696, %v1695
        %v1700 = vpack.c.b16 %v1698, %v1697
        %v1704 = vsel %vm568, %v1680, 0
        %1706 = vmatprep.subr.bf16.mxu0 0
        %1707 = vmatpush1.bf16.msra.mxu0 0
        %1708 = vmatprep.subr.bf16.mxu0 0
        %1709 = vmatpush1.bf16.msra.mxu0 0
        %1710 = vmatprep.subr.bf16.mxu0 0
        %1711 = vmatpush1.bf16.msra.mxu0 0
        %1712 = vmatprep.subr.bf16.mxu0 0
        %1713 = vmatpush1.bf16.msra.mxu0 0
        %1714 = vmatprep.subr.bf16.mxu0 0
        %1715 = vmatpush1.bf16.msra.mxu0 0
        %1716 = vmatprep.subr.bf16.mxu0 0
        %1717 = vmatpush1.bf16.msra.mxu0 0
        %1718 = vmatprep.subr.bf16.mxu0 0
        %1719 = vmatpush1.bf16.msra.mxu0 %v1700
        %1720 = vmatprep.subr.bf16.mxu0 0
        %1721 = vmatpush1.bf16.msra.mxu0 %v1699
        %1722 = vmatprep.subr.bf16.mxu0 0
        %1723 = vmatpush2.bf16.msra.mxu0 0
        %1724 = vmatprep.subr.bf16.mxu0 0
        %1725 = vmatpush2.bf16.msra.mxu0 0
        %1726 = vmatprep.subr.bf16.mxu0 0
        %1727 = vmatpush2.bf16.msra.mxu0 0
        %1728 = vmatprep.subr.bf16.mxu0 0
        %1729 = vmatpush2.bf16.msra.mxu0 0
        %1730 = vmatprep.subr.bf16.mxu0 0
        %1731 = vmatpush2.bf16.msra.mxu0 0
        %1732 = vmatprep.subr.bf16.mxu0 0
        %1733 = vmatpush2.bf16.msra.mxu0 0
        %1734 = vmatprep.subr.bf16.mxu0 0
        %1735 = vmatpush2.bf16.msra.mxu0 0
        %1736 = vmatprep.subr.bf16.mxu0 0
        %1737 = vmatpush2.bf16.msra.mxu0 0
        %1738 = vmatprep.mubr.bf16.mxu0 0
        %1739 = vmatmul.mubr.bf16.gmra.mxu0 %v1704
        %v1740 = vpop.f32.mrf.mxu0
        %v1741 = vadd.f32 %v1689, %v1740
        %v1742 = vpop.f32.mrf.mxu0
        %v1743 = vpop.f32.mrf.mxu0
        %v1744 = vadd.f32 %v1689, %v1743
        %v1745 = vpop.f32.mrf.mxu0
        %1746 = vdwg.mxu0
        %v1747 = vmul.f32 %v1741, 0.5
        %v1748 = vmul.f32 %v1744, 0.5
        %v1749 = vmul.f32 %v1741, 0.70710677
        %v1750 = vmul.f32 %v1744, 0.70710677
        %v1751 = verf.f32.pop %v1749
        %v1752 = verf.f32.pop %v1750
        %v1753 = vadd.f32 %v1751, 1.0
        %v1754 = vadd.f32 %v1752, 1.0
        %v1755 = vmul.f32 %v1747, %v1753
        %v1756 = vmul.f32 %v1748, %v1754
        %v1757 = vpack.c.bf16 %v1756, %v1755
        %v1758 = vld [vmem:[%s433] sm:$0xf]
        %v1759 = vld [vmem:[%s433 + $0x4] sm:$0xf]
        %v1760 = vld [vmem:[%s433 + $0x8] sm:$0xf]
        %v1761 = vld [vmem:[%s433 + $0xc] sm:$0xf]
        %v1762 = vld [vmem:[%s433 + $0x10] sm:$0xf]
        %v1763 = vld [vmem:[%s433 + $0x14] sm:$0xf]
        %v1764 = vld [vmem:[%s433 + $0x18] sm:$0xf]
        %v1765 = vld [vmem:[%s433 + $0x1c] sm:$0xf]
        %v1766 = vlaneseq
        %v1767 = vshrl.u32 %v1766, 7
        %v1768 = vsub.s32 6, %v1767
        %v1769 = vrot.slane %v546, %v1768
        %v1778 = vunpack.c.l.b16 %v1758
        %v1779 = vunpack.c.l.b16 %v1759
        %v1780 = vunpack.c.l.b16 %v1760
        %v1781 = vunpack.c.l.b16 %v1761
        %v1782 = vunpack.c.l.b16 %v1762
        %v1783 = vunpack.c.l.b16 %v1763
        %v1784 = vunpack.c.l.b16 %v1764
        %v1785 = vunpack.c.l.b16 %v1765
        %v1786 = vpack.c.b16 %v1779, %v1778
        %v1787 = vpack.c.b16 %v1781, %v1780
        %v1788 = vpack.c.b16 %v1783, %v1782
        %v1789 = vpack.c.b16 %v1785, %v1784
        %vm1794 = vcmask 523264
        %v1796 = vsel %vm1794, %v1757, 0
        %1798 = vmatprep.subr.bf16.mxu0 0
        %1799 = vmatpush1.bf16.msra.mxu0 0
        %1800 = vmatprep.subr.bf16.mxu0 0
        %1801 = vmatpush1.bf16.msra.mxu0 0
        %1802 = vmatprep.subr.bf16.mxu0 0
        %1803 = vmatpush1.bf16.msra.mxu0 0
        %1804 = vmatprep.subr.bf16.mxu0 0
        %1805 = vmatpush1.bf16.msra.mxu0 0
        %1806 = vmatprep.subr.bf16.mxu0 0
        %1807 = vmatpush1.bf16.msra.mxu0 %v1789
        %1808 = vmatprep.subr.bf16.mxu0 0
        %1809 = vmatpush1.bf16.msra.mxu0 %v1788
        %1810 = vmatprep.subr.bf16.mxu0 0
        %1811 = vmatpush1.bf16.msra.mxu0 %v1787
        %1812 = vmatprep.subr.bf16.mxu0 0
        %1813 = vmatpush1.bf16.msra.mxu0 %v1786
        %1814 = vmatprep.subr.bf16.mxu0 0
        %1815 = vmatpush2.bf16.msra.mxu0 0
        %1816 = vmatprep.subr.bf16.mxu0 0
        %1817 = vmatpush2.bf16.msra.mxu0 0
        %1818 = vmatprep.subr.bf16.mxu0 0
        %1819 = vmatpush2.bf16.msra.mxu0 0
        %1820 = vmatprep.subr.bf16.mxu0 0
        %1821 = vmatpush2.bf16.msra.mxu0 0
        %1822 = vmatprep.subr.bf16.mxu0 0
        %1823 = vmatpush2.bf16.msra.mxu0 0
        %1824 = vmatprep.subr.bf16.mxu0 0
        %1825 = vmatpush2.bf16.msra.mxu0 0
        %1826 = vmatprep.subr.bf16.mxu0 0
        %1827 = vmatpush2.bf16.msra.mxu0 0
        %1828 = vmatprep.subr.bf16.mxu0 0
        %1829 = vmatpush2.bf16.msra.mxu0 0
        %1830 = vmatprep.mubr.bf16.mxu0 0
        %1831 = vmatmul.mubr.bf16.gmra.mxu0 %v1796
        %v1832 = vpop.f32.mrf.mxu0
        %v1833 = vadd.f32 %v1769, %v1832
        %v1834 = vpop.f32.mrf.mxu0
        %v1835 = vpop.f32.mrf.mxu0
        %v1836 = vadd.f32 %v1769, %v1835
        %v1837 = vpop.f32.mrf.mxu0
        %1838 = vdwg.mxu0
        %v1839 = vadd.f32 %v1678, %v1833
        %v1840 = vadd.f32 %v1679, %v1836
        %v1841 = vsel %vm568, %v1839, 0.0
        %1842 = vadd.xlane.f32.xlu0 %v1841
        %v1843 = vpop.xlane.xlu0 %1842
        %v1844 = vsel %vm568, %v1840, 0.0
        %1845 = vadd.xlane.f32.xlu0 %v1844
        %v1846 = vpop.xlane.xlu0 %1845
        %v1847 = vmul.f32 %v1843, %v1647
        %v1848 = vmul.f32 %v1846, %v1647
        %v1849 = vsub.f32 %v1839, %v1847
        %v1850 = vsub.f32 %v1840, %v1848
        %v1851 = vmul.f32 %v1849, %v1849
        %v1852 = vmul.f32 %v1850, %v1850
        %v1853 = vsel %vm568, %v1851, 0.0
        %1854 = vadd.xlane.f32.xlu0 %v1853
        %v1855 = vpop.xlane.xlu0 %1854
        %v1856 = vsel %vm568, %v1852, 0.0
        %1857 = vadd.xlane.f32.xlu0 %v1856
        %v1858 = vpop.xlane.xlu0 %1857
        %v1859 = vmul.f32 %v1855, %v1647
        %v1860 = vmul.f32 %v1858, %v1647
        %v1861 = vadd.f32 %v1859, 0.02
        %v1862 = vadd.f32 %v1860, 0.02
        %v1863 = vrsqrt.pop %v1861
        %v1864 = vrsqrt.pop %v1862
        %v1865 = vmul.f32 %v1849, %v1863
        %v1866 = vmul.f32 %v1850, %v1864
        %v1867 = vlaneseq
        %v1868 = vshrl.u32 %v1867, 7
        %v1869 = vsub.s32 7, %v1868
        %v1870 = vrot.slane %v546, %v1869
        %v1871 = vmul.f32 %v1865, %v1870
        %v1872 = vmul.f32 %v1866, %v1870
        %v1873 = vlaneseq
        %v1874 = vshrl.u32 %v1873, 7
        %v1875 = vsub.s32 0, %v1874
        %v1876 = vrot.slane %v547, %v1875
        %v1877 = vadd.f32 %v1871, %v1876
        %v1878 = vadd.f32 %v1872, %v1876
        %1879 = vst.msk [vmem:[#allocation3] sm:$0xff] %vm568, %v1877
        %1880 = vst.msk [vmem:[#allocation3 + $0x8] sm:$0xff] %vm568, %v1878
        // Predicated region
        $region57: #{tpu_custom_call.1} parent=51 // pred_check
          %p1881 = pneg %p258
        $region58: #{tpu_custom_call.1} parent=51 // pred_check_branch
          %1883 = sbr.rel (%p1881) target = $region60
        $region59: #{tpu_custom_call.1} parent=51 // pred_region
          %s1884 = smul.u32 2, %s24
          %s1886 = ssub.s32 256, 256
          %1887 = vsyncadd [#allocation4], %s1886
          %s1888 = smul.addr %s1884, 128
          %s1889 = scalar_lea.hbm %s8, %s1888
          %s1890 = sshll.u32 [#allocation3], 4
          %s1891 = int_to_ptr.vmem [resolvable:$true] %s1890
          %1896 = dma.vmem_to_hbm [thread:$0]  %s1891, 256, %s1889, [#allocation4], 128, 128, 8
        $region60: #{tpu_custom_call.1} parent=51 // pred_fallthru
          _
        // Predicated region
        $region61: #{tpu_custom_call.1} parent=51 // pred_check
          %p1897 = pneg %p258
        $region62: #{tpu_custom_call.1} parent=51 // pred_check_branch
          %1899 = sbr.rel (%p1897) target = $region64
        $region63: #{tpu_custom_call.1} parent=51 // pred_region
          %1900 = dma.done [#allocation4], 256
        $region64: #{tpu_custom_call.1} parent=51 // pred_fallthru
          _
      $region52: #{tpu_custom_call.1} parent=5 // pred_fallthru
        _
      %p1901 = scmp.le.s32.totalorder 2, %s15
      // Predicated region
      $region65: #{tpu_custom_call.1} parent=5 // pred_check
        %p1902 = pneg %p1901
      $region66: #{tpu_custom_call.1} parent=5 // pred_check_branch
        %1904 = sbr.rel (%p1902) target = $region68
      $region67: #{tpu_custom_call.1} parent=5 // pred_region
        %s1905 = ssub.s32 %s15, 2
      $region68: #{tpu_custom_call.1} parent=5 // pred_fallthru
        _
    $region6: #{tpu_custom_call.1} parent=1 // loop_footer
      %s19 = sadd.s32 1, %s15
    $region7: #{tpu_custom_call.1} parent=1 // loop_footer_branch
      %14 = sbr.rel target = $region3
    $region8: #{tpu_custom_call.1} parent=1 // loop_exit
      _
    %1906 = vsyncpa [#allocation4], 1
    %s1907 = scalar_lea.sflag [#allocation4], 1
    %1908 = vsyncpa %s1907, 1

</llo_original>
